<compile_context>
chip_gen: v7x
topology: tpu7x:2x2x1
jax: 0.10.0
libtpu: 0.0.40
codegen_flags: <defaults>
</compile_context>

<pallas_src>
import functools
import math

import jax
import jax.numpy as jnp
import numpy as np
from jax.experimental import pallas as pl
from jax.experimental.pallas import tpu as pltpu

BN_EPS = 1e-5
LANES = 128


def _round_up(x, m):
    return ((x + m - 1) // m) * m


# -----------------------------------------------------------------------------
# Fused InvertedResidual Pallas kernel (one grid step == one batch image)
# -----------------------------------------------------------------------------
def _inverted_residual_kernel(x_ref, *rest, stride, identity, has_expand):
    # Ref layout (all channel dims padded to a multiple of 128 lanes):
    #   x_ref   : (1, H, W, Cin_p)  f32
    #   [w1_ref : (Cin_p, Ch_p) bf16, b1_ref : (1, Ch_p) f32]   (only if has_expand)
    #   wdw_ref : (9, Ch_p)  f32   depthwise taps (di*3+dj), BN2 scale folded
    #   b2_ref  : (1, Ch_p)  f32
    #   w2_ref  : (Ch_p, Co_p) bf16, BN3 scale folded
    #   b3_ref  : (1, Co_p)  f32
    #   o_ref   : (1, Ho, Wo, Co_p) f32
    #   hbuf_ref: (H+2, W+2, Ch_p)  f32 VMEM scratch (expanded activation + halo)
    if has_expand:
        (w1_ref, b1_ref, wdw_ref, b2_ref, w2_ref, b3_ref, o_ref, hbuf_ref) = rest
    else:
        (wdw_ref, b2_ref, w2_ref, b3_ref, o_ref, hbuf_ref) = rest

    H, W = x_ref.shape[1], x_ref.shape[2]
    Ho, Wo = o_ref.shape[1], o_ref.shape[2]
    Ch = hbuf_ref.shape[2]

    # ---- zero the scratch (gives the 1-pixel zero halo); interior is overwritten ----
    hbuf_ref[...] = jnp.zeros_like(hbuf_ref)

    # ---- stage 1: 1x1 expand + BN1 + ReLU (MXU, bf16 operands, f32 accumulate) ----
    if has_expand:
        xin = x_ref[0].reshape(H * W, -1).astype(jnp.bfloat16)
        h = jnp.dot(xin, w1_ref[...], preferred_element_type=jnp.float32)
        h = jnp.maximum(h + b1_ref[...], 0.0)
        hbuf_ref[1:H + 1, 1:W + 1, :] = h.reshape(H, W, Ch)
    else:
        # expand_ratio == 1: hidden == inp, no expansion conv / ReLU before depthwise
        hbuf_ref[1:H + 1, 1:W + 1, :] = x_ref[0]

    # ---- stage 2: depthwise 3x3 (stride folded into the tap loads) + BN2 + ReLU (VPU) ----
    acc = jnp.zeros((Ho, Wo, Ch), jnp.float32)
    for di in range(3):
        for dj in range(3):
            if stride == 1:
                tap = hbuf_ref[pl.ds(di, Ho), pl.ds(dj, Wo), :]
            else:
                tap = hbuf_ref[pl.ds(di, Ho, stride=stride),
                               pl.ds(dj, Wo, stride=stride), :]
            acc = acc + tap * wdw_ref[pl.ds(di * 3 + dj, 1), :]
    h2 = jnp.maximum(acc + b2_ref[...].reshape(1, 1, Ch), 0.0)

    # ---- stage 3: 1x1 project + BN3 (MXU) + fused identity residual ----
    y = jnp.dot(h2.reshape(Ho * Wo, Ch).astype(jnp.bfloat16), w2_ref[...],
                preferred_element_type=jnp.float32)
    y = y + b3_ref[...]
    if identity:
        y = y + x_ref[0].reshape(H * W, -1)   # Cin_p == Co_p when identity
    o_ref[...] = y.reshape(o_ref.shape)


def run_block_pallas(prep, x_nhwc):
    """x_nhwc: (N, H, W, Cin) float32 -> (N, Ho, Wo, oup) float32."""
    N, H, W, Cin = x_nhwc.shape
    stride = prep['stride']
    Ho = (H + 2 - 3) // stride + 1
    Wo = (W + 2 - 3) // stride + 1
    cin_p, ch_p, co_p = prep['cin_p'], prep['ch_p'], prep['co_p']

    xp = jnp.pad(x_nhwc.astype(jnp.float32),
                 ((0, 0), (0, 0), (0, 0), (0, cin_p - Cin)))

    kern = functools.partial(_inverted_residual_kernel, stride=stride,
                             identity=prep['identity'], has_expand=prep['has_expand'])

    args = [xp]
    in_specs = [pl.BlockSpec((1, H, W, cin_p), lambda n: (n, 0, 0, 0))]
    if prep['has_expand']:
        args += [prep['w1'], prep['b1']]
        in_specs += [pl.BlockSpec((cin_p, ch_p), lambda n: (0, 0)),
                     pl.BlockSpec((1, ch_p), lambda n: (0, 0))]
    args += [prep['wdw'], prep['b2'], prep['w2'], prep['b3']]
    in_specs += [pl.BlockSpec((9, ch_p), lambda n: (0, 0)),
                 pl.BlockSpec((1, ch_p), lambda n: (0, 0)),
                 pl.BlockSpec((ch_p, co_p), lambda n: (0, 0)),
                 pl.BlockSpec((1, co_p), lambda n: (0, 0))]

    out_p = pl.pallas_call(
        kern,
        out_shape=jax.ShapeDtypeStruct((N, Ho, Wo, co_p), jnp.float32),
        grid=(N,),
        in_specs=in_specs,
        out_specs=pl.BlockSpec((1, Ho, Wo, co_p), lambda n: (n, 0, 0, 0)),
        scratch_shapes=[pltpu.VMEM((H + 2, W + 2, ch_p), jnp.float32)],
        compiler_params=pltpu.CompilerParams(
            dimension_semantics=("parallel",),          # batch axis -> both TCs on v7x
            vmem_limit_bytes=32 * 1024 * 1024),
    )(*args)
    return out_p[..., :prep['oup']]


def inverted_residual_forward(prep, x_nchw):
    """Mirrors InvertedResidual.forward: returns (out, mask, temperature)."""
    x = jnp.transpose(x_nchw, (0, 2, 3, 1)).astype(jnp.float32)   # NCHW -> NHWC
    y = run_block_pallas(prep, x)
    out = jnp.transpose(y, (0, 3, 1, 2))                          # back to NCHW
    # No QuanConv2d / QuanLinear modules in this block -> empty tuples.
    return out, (), ()


# -----------------------------------------------------------------------------
# Parameters: PyTorch-style raw params, one-time prep (fold BN, pad, transpose, cast)
# -----------------------------------------------------------------------------
def _fresh_bn(c):
    return dict(gamma=jnp.ones((c,), jnp.float32), beta=jnp.zeros((c,), jnp.float32),
                mean=jnp.zeros((c,), jnp.float32), var=jnp.ones((c,), jnp.float32))


def _fold_bn(bn):
    scale = bn['gamma'] / jnp.sqrt(bn['var'] + BN_EPS)
    bias = bn['beta'] - bn['mean'] * scale
    return scale, bias


def make_block_params(key, inp, oup, stride, expand_ratio):
    assert stride in (1, 2)
    hidden = int(round(inp * expand_ratio))
    ks = jax.random.split(key, 3)

    def conv_w(k, cout, cin, ksz):        # PyTorch _initialize_weights-style init
        n = ksz * ksz * cout
        return jax.random.normal(k, (cout, cin, ksz, ksz), jnp.float32) * math.sqrt(2.0 / n)

    raw = dict(inp=inp, oup=oup, stride=stride, expand_ratio=expand_ratio,
               hidden=hidden, identity=(stride == 1 and inp == oup))
    if expand_ratio != 1:
        raw['w1'] = conv_w(ks[0], hidden, inp, 1)
        raw['bn1'] = _fresh_bn(hidden)
    raw['wdw'] = conv_w(ks[1], hidden, 1, 3)          # depthwise: (hidden, 1, 3, 3)
    raw['bn2'] = _fresh_bn(hidden)
    raw['w2'] = conv_w(ks[2], oup, hidden, 1)
    raw['bn3'] = _fresh_bn(oup)
    return raw


def prepare_block(raw):
    """One-time: fold BN scale into weights, transpose, pad channels to 128 lanes, cast bf16."""
    inp, oup, hidden = raw['inp'], raw['oup'], raw['hidden']
    cin_p = max(LANES, _round_up(inp, LANES))
    ch_p = max(LANES, _round_up(hidden, LANES))
    co_p = max(LANES, _round_up(oup, LANES))
    prep = dict(stride=raw['stride'], identity=raw['identity'],
                has_expand=(raw['expand_ratio'] != 1), oup=oup,
                cin_p=cin_p, ch_p=ch_p, co_p=co_p)

    def pad2(a, r, c):
        return jnp.pad(a, ((0, r - a.shape[0]), (0, c - a.shape[1])))

    if prep['has_expand']:
        s1, bi1 = _fold_bn(raw['bn1'])
        w1 = raw['w1'].reshape(hidden, inp) * s1[:, None]          # fold BN1 scale
        prep['w1'] = pad2(w1.T, cin_p, ch_p).astype(jnp.bfloat16)  # (Cin_p, Ch_p)
        prep['b1'] = pad2(bi1.reshape(1, hidden), 1, ch_p)
    s2, bi2 = _fold_bn(raw['bn2'])
    wdw = (raw['wdw'].reshape(hidden, 9) * s2[:, None]).T          # (9, hidden), (di,dj) order
    prep['wdw'] = pad2(wdw, 9, ch_p).astype(jnp.float32)
    prep['b2'] = pad2(bi2.reshape(1, hidden), 1, ch_p)
    s3, bi3 = _fold_bn(raw['bn3'])
    w2 = raw['w2'].reshape(oup, hidden) * s3[:, None]
    prep['w2'] = pad2(w2.T, ch_p, co_p).astype(jnp.bfloat16)       # (Ch_p, Co_p)
    prep['b3'] = pad2(bi3.reshape(1, oup), 1, co_p)
    return prep


# -----------------------------------------------------------------------------
# Pure-JAX float32 reference (eval-mode BN), for a correctness sanity check
# -----------------------------------------------------------------------------
def ref_block_forward(raw, x_nhwc):
    dn = ('NHWC', 'HWIO', 'NHWC')

    def bn_apply(y, bn):
        return (y - bn['mean']) / jnp.sqrt(bn['var'] + BN_EPS) * bn['gamma'] + bn['beta']

    h = x_nhwc
    if raw['expand_ratio'] != 1:
        w = jnp.transpose(raw['w1'], (2, 3, 1, 0))
        h = jax.lax.conv_general_dilated(h, w, (1, 1), 'VALID', dimension_numbers=dn)
        h = jnp.maximum(bn_apply(h, raw['bn1']), 0.0)
    wd = jnp.transpose(raw['wdw'], (2, 3, 1, 0))
    h = jax.lax.conv_general_dilated(h, wd, (raw['stride'],) * 2, ((1, 1), (1, 1)),
                                     dimension_numbers=dn,
                                     feature_group_count=raw['hidden'])
    h = jnp.maximum(bn_apply(h, raw['bn2']), 0.0)
    w2 = jnp.transpose(raw['w2'], (2, 3, 1, 0))
    h = jax.lax.conv_general_dilated(h, w2, (1, 1), 'VALID', dimension_numbers=dn)
    h = bn_apply(h, raw['bn3'])
    if raw['identity']:
        h = x_nhwc + h
    return h


# TODO(synk): train-mode BatchNorm (batch statistics) is not reproduced; eval-mode
#             running stats are folded into the weights.

if __name__ == "__main__":
    key = jax.random.PRNGKey(0)
    kx, k1, k2, k3 = jax.random.split(key, 4)

    N, C, Hs, Ws = 2, 8, 16, 16                         # small shapes, NCHW like PyTorch
    x_nchw = jax.random.normal(kx, (N, C, Hs, Ws), jnp.float32)
    x_nhwc = jnp.transpose(x_nchw, (0, 2, 3, 1))

    configs = [
        dict(inp=8, oup=8,  stride=1, expand_ratio=6),   # expansion + identity residual
        dict(inp=8, oup=16, stride=2, expand_ratio=6),   # strided, no residual
        dict(inp=8, oup=8,  stride=1, expand_ratio=1),   # no expansion branch, identity
    ]
    for cfg, kk in zip(configs, (k1, k2, k3)):
        raw = make_block_params(kk, **cfg)
        prep = prepare_block(raw)
        out, mask, temperature = inverted_residual_forward(prep, x_nchw)
        jax.block_until_ready(out)

        ref = jnp.transpose(ref_block_forward(raw, x_nhwc), (0, 3, 1, 2))
        assert out.shape == ref.shape, (out.shape, ref.shape)
        np.testing.assert_allclose(np.asarray(out), np.asarray(ref), rtol=2e-2, atol=2e-2)
        assert mask == () and temperature == ()

    print("KERNEL_OK")
</pallas_src>

<mosaic_0001>
module attributes {stable_mosaic.version = 11 : i64} {
  func.func @_inverted_residual_kernel(%arg0: i32, %arg1: memref<1x16x16x128xf32, #tpu.memory_space<vmem>>, %arg2: memref<128x128xbf16, #tpu.memory_space<vmem>>, %arg3: memref<1x128xf32, #tpu.memory_space<vmem>>, %arg4: memref<9x128xf32, #tpu.memory_space<vmem>>, %arg5: memref<1x128xf32, #tpu.memory_space<vmem>>, %arg6: memref<128x128xbf16, #tpu.memory_space<vmem>>, %arg7: memref<1x128xf32, #tpu.memory_space<vmem>>, %arg8: memref<1x16x16x128xf32, #tpu.memory_space<vmem>>, %arg9: memref<18x18x128xf32, #tpu.memory_space<vmem>>) attributes {dimension_semantics = [#tpu.dimension_semantics<parallel>], iteration_bounds = array<i64: 2>, scalar_prefetch = 0 : i64, scratch_operands = 1 : i64, tpu.core_type = #tpu.core_type<tc>, window_params = [{transform_indices = @transform_0, window_bounds = array<i64: 1, 16, 16, 128>}, {pipeline_mode = #tpu.pipeline_mode<synchronous>, transform_indices = @transform_1, window_bounds = array<i64: 128, 128>}, {pipeline_mode = #tpu.pipeline_mode<synchronous>, transform_indices = @transform_2, window_bounds = array<i64: 1, 128>}, {pipeline_mode = #tpu.pipeline_mode<synchronous>, transform_indices = @transform_3, window_bounds = array<i64: 9, 128>}, {pipeline_mode = #tpu.pipeline_mode<synchronous>, transform_indices = @transform_4, window_bounds = array<i64: 1, 128>}, {pipeline_mode = #tpu.pipeline_mode<synchronous>, transform_indices = @transform_5, window_bounds = array<i64: 128, 128>}, {pipeline_mode = #tpu.pipeline_mode<synchronous>, transform_indices = @transform_6, window_bounds = array<i64: 1, 128>}, {transform_indices = @transform_7, window_bounds = array<i64: 1, 16, 16, 128>}]} {
    %cst = arith.constant 0.000000e+00 : f32
    %0 = vector.broadcast %cst : f32 to vector<18x18x128xf32>
    %c0 = arith.constant 0 : index
    %c0_0 = arith.constant 0 : index
    %c0_1 = arith.constant 0 : index
    %1 = vector.load %arg9[%c0, %c0_0, %c0_1] : memref<18x18x128xf32, #tpu.memory_space<vmem>>, vector<18x18x128xf32>
    tpu.vector_store %arg9[%c0, %c0_0, %c0_1], %0 {strides = array<i32>} : memref<18x18x128xf32, #tpu.memory_space<vmem>>, vector<18x18x128xf32>,
    %c0_2 = arith.constant 0 : index
    %c0_3 = arith.constant 0 : index
    %c0_4 = arith.constant 0 : index
    %c0_5 = arith.constant 0 : index
    %2 = vector.load %arg1[%c0_2, %c0_3, %c0_4, %c0_5] : memref<1x16x16x128xf32, #tpu.memory_space<vmem>>, vector<1x16x16x128xf32>
    %3 = vector.shape_cast %2 : vector<1x16x16x128xf32> to vector<16x16x128xf32>
    %4 = vector.shape_cast %3 : vector<16x16x128xf32> to vector<256x128xf32>
    %5 = arith.truncf %4 : vector<256x128xf32> to vector<256x128xbf16>
    %c0_6 = arith.constant 0 : index
    %c0_7 = arith.constant 0 : index
    %6 = vector.load %arg2[%c0_6, %c0_7] : memref<128x128xbf16, #tpu.memory_space<vmem>>, vector<128x128xbf16>
    %cst_8 = arith.constant dense<0.000000e+00> : vector<256x128xf32>
    %7 = tpu.matmul %5, %6, %cst_8 {dimension_numbers = #tpu.dot_dimension_numbers<[1], [0], [0], [1], [0, 0, 1, 1], [], []>} : vector<256x128xbf16>, vector<128x128xbf16>, vector<256x128xf32> -> vector<256x128xf32>
    %c0_9 = arith.constant 0 : index
    %c0_10 = arith.constant 0 : index
    %8 = vector.load %arg3[%c0_9, %c0_10] : memref<1x128xf32, #tpu.memory_space<vmem>>, vector<1x128xf32>
    %9 = vector.broadcast %8 : vector<1x128xf32> to vector<256x128xf32>
    %10 = arith.addf %7, %9 : vector<256x128xf32>
    %cst_11 = arith.constant 0.000000e+00 : f32
    %11 = vector.broadcast %cst_11 : f32 to vector<256x128xf32>
    %12 = arith.maximumf %10, %11 : vector<256x128xf32>
    %13 = vector.shape_cast %12 : vector<256x128xf32> to vector<16x16x128xf32>
    %c1 = arith.constant 1 : index
    %c1_12 = arith.constant 1 : index
    %c0_13 = arith.constant 0 : index
    %14 = vector.load %arg9[%c1, %c1_12, %c0_13] : memref<18x18x128xf32, #tpu.memory_space<vmem>>, vector<16x16x128xf32>
    tpu.vector_store %arg9[%c1, %c1_12, %c0_13], %13 {strides = array<i32>} : memref<18x18x128xf32, #tpu.memory_space<vmem>>, vector<16x16x128xf32>,
    %cst_14 = arith.constant 0.000000e+00 : f32
    %15 = vector.broadcast %cst_14 : f32 to vector<16x16x128xf32>
    %c0_15 = arith.constant 0 : index
    %c0_16 = arith.constant 0 : index
    %c0_17 = arith.constant 0 : index
    %16 = vector.load %arg9[%c0_15, %c0_16, %c0_17] : memref<18x18x128xf32, #tpu.memory_space<vmem>>, vector<16x16x128xf32>
    %c0_18 = arith.constant 0 : index
    %c0_19 = arith.constant 0 : index
    %17 = vector.load %arg4[%c0_18, %c0_19] : memref<9x128xf32, #tpu.memory_space<vmem>>, vector<1x128xf32>
    %18 = vector.shape_cast %17 : vector<1x128xf32> to vector<1x1x128xf32>
    %19 = vector.broadcast %18 : vector<1x1x128xf32> to vector<16x16x128xf32>
    %20 = arith.mulf %16, %19 : vector<16x16x128xf32>
    %21 = arith.addf %15, %20 : vector<16x16x128xf32>
    %c0_20 = arith.constant 0 : index
    %c1_21 = arith.constant 1 : index
    %c0_22 = arith.constant 0 : index
    %22 = vector.load %arg9[%c0_20, %c1_21, %c0_22] : memref<18x18x128xf32, #tpu.memory_space<vmem>>, vector<16x16x128xf32>
    %c1_23 = arith.constant 1 : index
    %c0_24 = arith.constant 0 : index
    %23 = vector.load %arg4[%c1_23, %c0_24] : memref<9x128xf32, #tpu.memory_space<vmem>>, vector<1x128xf32>
    %24 = vector.shape_cast %23 : vector<1x128xf32> to vector<1x1x128xf32>
    %25 = vector.broadcast %24 : vector<1x1x128xf32> to vector<16x16x128xf32>
    %26 = arith.mulf %22, %25 : vector<16x16x128xf32>
    %27 = arith.addf %21, %26 : vector<16x16x128xf32>
    %c0_25 = arith.constant 0 : index
    %c2 = arith.constant 2 : index
    %c0_26 = arith.constant 0 : index
    %28 = vector.load %arg9[%c0_25, %c2, %c0_26] : memref<18x18x128xf32, #tpu.memory_space<vmem>>, vector<16x16x128xf32>
    %c2_27 = arith.constant 2 : index
    %c0_28 = arith.constant 0 : index
    %29 = vector.load %arg4[%c2_27, %c0_28] : memref<9x128xf32, #tpu.memory_space<vmem>>, vector<1x128xf32>
    %30 = vector.shape_cast %29 : vector<1x128xf32> to vector<1x1x128xf32>
    %31 = vector.broadcast %30 : vector<1x1x128xf32> to vector<16x16x128xf32>
    %32 = arith.mulf %28, %31 : vector<16x16x128xf32>
    %33 = arith.addf %27, %32 : vector<16x16x128xf32>
    %c1_29 = arith.constant 1 : index
    %c0_30 = arith.constant 0 : index
    %c0_31 = arith.constant 0 : index
    %34 = vector.load %arg9[%c1_29, %c0_30, %c0_31] : memref<18x18x128xf32, #tpu.memory_space<vmem>>, vector<16x16x128xf32>
    %c3 = arith.constant 3 : index
    %c0_32 = arith.constant 0 : index
    %35 = vector.load %arg4[%c3, %c0_32] : memref<9x128xf32, #tpu.memory_space<vmem>>, vector<1x128xf32>
    %36 = vector.shape_cast %35 : vector<1x128xf32> to vector<1x1x128xf32>
    %37 = vector.broadcast %36 : vector<1x1x128xf32> to vector<16x16x128xf32>
    %38 = arith.mulf %34, %37 : vector<16x16x128xf32>
    %39 = arith.addf %33, %38 : vector<16x16x128xf32>
    %c1_33 = arith.constant 1 : index
    %c1_34 = arith.constant 1 : index
    %c0_35 = arith.constant 0 : index
    %40 = vector.load %arg9[%c1_33, %c1_34, %c0_35] : memref<18x18x128xf32, #tpu.memory_space<vmem>>, vector<16x16x128xf32>
    %c4 = arith.constant 4 : index
    %c0_36 = arith.constant 0 : index
    %41 = vector.load %arg4[%c4, %c0_36] : memref<9x128xf32, #tpu.memory_space<vmem>>, vector<1x128xf32>
    %42 = vector.shape_cast %41 : vector<1x128xf32> to vector<1x1x128xf32>
    %43 = vector.broadcast %42 : vector<1x1x128xf32> to vector<16x16x128xf32>
    %44 = arith.mulf %40, %43 : vector<16x16x128xf32>
    %45 = arith.addf %39, %44 : vector<16x16x128xf32>
    %c1_37 = arith.constant 1 : index
    %c2_38 = arith.constant 2 : index
    %c0_39 = arith.constant 0 : index
    %46 = vector.load %arg9[%c1_37, %c2_38, %c0_39] : memref<18x18x128xf32, #tpu.memory_space<vmem>>, vector<16x16x128xf32>
    %c5 = arith.constant 5 : index
    %c0_40 = arith.constant 0 : index
    %47 = vector.load %arg4[%c5, %c0_40] : memref<9x128xf32, #tpu.memory_space<vmem>>, vector<1x128xf32>
    %48 = vector.shape_cast %47 : vector<1x128xf32> to vector<1x1x128xf32>
    %49 = vector.broadcast %48 : vector<1x1x128xf32> to vector<16x16x128xf32>
    %50 = arith.mulf %46, %49 : vector<16x16x128xf32>
    %51 = arith.addf %45, %50 : vector<16x16x128xf32>
    %c2_41 = arith.constant 2 : index
    %c0_42 = arith.constant 0 : index
    %c0_43 = arith.constant 0 : index
    %52 = vector.load %arg9[%c2_41, %c0_42, %c0_43] : memref<18x18x128xf32, #tpu.memory_space<vmem>>, vector<16x16x128xf32>
    %c6 = arith.constant 6 : index
    %c0_44 = arith.constant 0 : index
    %53 = vector.load %arg4[%c6, %c0_44] : memref<9x128xf32, #tpu.memory_space<vmem>>, vector<1x128xf32>
    %54 = vector.shape_cast %53 : vector<1x128xf32> to vector<1x1x128xf32>
    %55 = vector.broadcast %54 : vector<1x1x128xf32> to vector<16x16x128xf32>
    %56 = arith.mulf %52, %55 : vector<16x16x128xf32>
    %57 = arith.addf %51, %56 : vector<16x16x128xf32>
    %c2_45 = arith.constant 2 : index
    %c1_46 = arith.constant 1 : index
    %c0_47 = arith.constant 0 : index
    %58 = vector.load %arg9[%c2_45, %c1_46, %c0_47] : memref<18x18x128xf32, #tpu.memory_space<vmem>>, vector<16x16x128xf32>
    %c7 = arith.constant 7 : index
    %c0_48 = arith.constant 0 : index
    %59 = vector.load %arg4[%c7, %c0_48] : memref<9x128xf32, #tpu.memory_space<vmem>>, vector<1x128xf32>
    %60 = vector.shape_cast %59 : vector<1x128xf32> to vector<1x1x128xf32>
    %61 = vector.broadcast %60 : vector<1x1x128xf32> to vector<16x16x128xf32>
    %62 = arith.mulf %58, %61 : vector<16x16x128xf32>
    %63 = arith.addf %57, %62 : vector<16x16x128xf32>
    %c2_49 = arith.constant 2 : index
    %c2_50 = arith.constant 2 : index
    %c0_51 = arith.constant 0 : index
    %64 = vector.load %arg9[%c2_49, %c2_50, %c0_51] : memref<18x18x128xf32, #tpu.memory_space<vmem>>, vector<16x16x128xf32>
    %c8 = arith.constant 8 : index
    %c0_52 = arith.constant 0 : index
    %65 = vector.load %arg4[%c8, %c0_52] : memref<9x128xf32, #tpu.memory_space<vmem>>, vector<1x128xf32>
    %66 = vector.shape_cast %65 : vector<1x128xf32> to vector<1x1x128xf32>
    %67 = vector.broadcast %66 : vector<1x1x128xf32> to vector<16x16x128xf32>
    %68 = arith.mulf %64, %67 : vector<16x16x128xf32>
    %69 = arith.addf %63, %68 : vector<16x16x128xf32>
    %c0_53 = arith.constant 0 : index
    %c0_54 = arith.constant 0 : index
    %70 = vector.load %arg5[%c0_53, %c0_54] : memref<1x128xf32, #tpu.memory_space<vmem>>, vector<1x128xf32>
    %71 = vector.shape_cast %70 : vector<1x128xf32> to vector<1x1x128xf32>
    %72 = vector.broadcast %71 : vector<1x1x128xf32> to vector<16x16x128xf32>
    %73 = arith.addf %69, %72 : vector<16x16x128xf32>
    %cst_55 = arith.constant 0.000000e+00 : f32
    %74 = vector.broadcast %cst_55 : f32 to vector<16x16x128xf32>
    %75 = arith.maximumf %73, %74 : vector<16x16x128xf32>
    %76 = vector.shape_cast %75 : vector<16x16x128xf32> to vector<256x128xf32>
    %77 = arith.truncf %76 : vector<256x128xf32> to vector<256x128xbf16>
    %c0_56 = arith.constant 0 : index
    %c0_57 = arith.constant 0 : index
    %78 = vector.load %arg6[%c0_56, %c0_57] : memref<128x128xbf16, #tpu.memory_space<vmem>>, vector<128x128xbf16>
    %cst_58 = arith.constant dense<0.000000e+00> : vector<256x128xf32>
    %79 = tpu.matmul %77, %78, %cst_58 {dimension_numbers = #tpu.dot_dimension_numbers<[1], [0], [0], [1], [0, 0, 1, 1], [], []>} : vector<256x128xbf16>, vector<128x128xbf16>, vector<256x128xf32> -> vector<256x128xf32>
    %c0_59 = arith.constant 0 : index
    %c0_60 = arith.constant 0 : index
    %80 = vector.load %arg7[%c0_59, %c0_60] : memref<1x128xf32, #tpu.memory_space<vmem>>, vector<1x128xf32>
    %81 = vector.broadcast %80 : vector<1x128xf32> to vector<256x128xf32>
    %82 = arith.addf %79, %81 : vector<256x128xf32>
    %c0_61 = arith.constant 0 : index
    %c0_62 = arith.constant 0 : index
    %c0_63 = arith.constant 0 : index
    %c0_64 = arith.constant 0 : index
    %83 = vector.load %arg1[%c0_61, %c0_62, %c0_63, %c0_64] : memref<1x16x16x128xf32, #tpu.memory_space<vmem>>, vector<1x16x16x128xf32>
    %84 = vector.shape_cast %83 : vector<1x16x16x128xf32> to vector<16x16x128xf32>
    %85 = vector.shape_cast %84 : vector<16x16x128xf32> to vector<256x128xf32>
    %86 = arith.addf %82, %85 : vector<256x128xf32>
    %87 = vector.shape_cast %86 : vector<256x128xf32> to vector<1x16x16x128xf32>
    %c0_65 = arith.constant 0 : index
    %c0_66 = arith.constant 0 : index
    %c0_67 = arith.constant 0 : index
    %c0_68 = arith.constant 0 : index
    %88 = vector.load %arg8[%c0_65, %c0_66, %c0_67, %c0_68] : memref<1x16x16x128xf32, #tpu.memory_space<vmem>>, vector<1x16x16x128xf32>
    tpu.vector_store %arg8[%c0_65, %c0_66, %c0_67, %c0_68], %87 {strides = array<i32>} : memref<1x16x16x128xf32, #tpu.memory_space<vmem>>, vector<1x16x16x128xf32>,
    return
  }
  func.func @transform_0(%arg0: i32) -> (i32, i32, i32, i32) {
    %c0_i32 = arith.constant 0 : i32
    %c0_i32_0 = arith.constant 0 : i32
    %c0_i32_1 = arith.constant 0 : i32
    %c0_i32_2 = arith.constant 0 : i32
    return %arg0, %c0_i32, %c0_i32_0, %c0_i32_1 : i32, i32, i32, i32
  }
  func.func @transform_1(%arg0: i32) -> (i32, i32) {
    %c0_i32 = arith.constant 0 : i32
    %c0_i32_0 = arith.constant 0 : i32
    %c0_i32_1 = arith.constant 0 : i32
    return %c0_i32, %c0_i32_0 : i32, i32
  }
  func.func @transform_2(%arg0: i32) -> (i32, i32) {
    %c0_i32 = arith.constant 0 : i32
    %c0_i32_0 = arith.constant 0 : i32
    %c0_i32_1 = arith.constant 0 : i32
    return %c0_i32, %c0_i32_0 : i32, i32
  }
  func.func @transform_3(%arg0: i32) -> (i32, i32) {
    %c0_i32 = arith.constant 0 : i32
    %c0_i32_0 = arith.constant 0 : i32
    %c0_i32_1 = arith.constant 0 : i32
    return %c0_i32, %c0_i32_0 : i32, i32
  }
  func.func @transform_4(%arg0: i32) -> (i32, i32) {
    %c0_i32 = arith.constant 0 : i32
    %c0_i32_0 = arith.constant 0 : i32
    %c0_i32_1 = arith.constant 0 : i32
    return %c0_i32, %c0_i32_0 : i32, i32
  }
  func.func @transform_5(%arg0: i32) -> (i32, i32) {
    %c0_i32 = arith.constant 0 : i32
    %c0_i32_0 = arith.constant 0 : i32
    %c0_i32_1 = arith.constant 0 : i32
    return %c0_i32, %c0_i32_0 : i32, i32
  }
  func.func @transform_6(%arg0: i32) -> (i32, i32) {
    %c0_i32 = arith.constant 0 : i32
    %c0_i32_0 = arith.constant 0 : i32
    %c0_i32_1 = arith.constant 0 : i32
    return %c0_i32, %c0_i32_0 : i32, i32
  }
  func.func @transform_7(%arg0: i32) -> (i32, i32, i32, i32) {
    %c0_i32 = arith.constant 0 : i32
    %c0_i32_0 = arith.constant 0 : i32
    %c0_i32_1 = arith.constant 0 : i32
    %c0_i32_2 = arith.constant 0 : i32
    return %arg0, %c0_i32, %c0_i32_0, %c0_i32_1 : i32, i32, i32, i32
  }
}

</mosaic_0001>

<llo_original>
// kernel: tpu_custom_call.1
$region0: #{tpu_custom_call.1}
  #allocation0 [shape = 'u32[]', space=smem, size = 0x4, offset = 0x4, fixed_abs, tag = 'smem constant byte address 0x4 - core index']
  #allocation1 [shape = 'u32[144,128]{1,0:T(1,128)}', space=vmem, size = 0x12000, scoped, tag = 'internal scratch']
  #allocation2 [shape = 'f32[18,18,128]{2,1,0:T(8,128)}', space=vmem, size = 0x36000, scoped, tag = 'scratch operand']
  %s0 = inlined_call_operand.hbm [shape: f32[2,16,16,128], index: 0, kind: input, shape index: {}]
  %s1 = inlined_call_operand.hbm [shape: bf16[128,128], index: 1, kind: input, shape index: {}]
  %s2 = inlined_call_operand.vmem [shape: f32[1,128], index: 2, kind: input, shape index: {}]
  %s3 = inlined_call_operand.hbm [shape: f32[9,128], index: 3, kind: input, shape index: {}]
  %s4 = inlined_call_operand.vmem [shape: f32[1,128], index: 4, kind: input, shape index: {}]
  %s5 = inlined_call_operand.hbm [shape: bf16[128,128], index: 5, kind: input, shape index: {}]
  %s6 = inlined_call_operand.vmem [shape: f32[1,128], index: 6, kind: input, shape index: {}]
  %s7 = inlined_call_operand.hbm [shape: f32[2,16,16,128], index: 7, kind: output, shape index: {}]
  %s8 = sld [smem:[#allocation0]]
  $region77: #{tpu_custom_call.1} parent=0
    _
  %s10 = ssub.s32 1, %s8
  %s11 = scalar_select 0, %s10, %s8
  $region1: #{tpu_custom_call.1} parent=0
    #allocation3 [shape = 'u8[262144]{0}', space=vmem, size = 0x40000, scoped, tag = 'input window, operand 0']
    #allocation4 [shape = 's32[2]{0}', space=sflag, size = 0x8, scoped, tag = 'scoped memory for tpu_custom_call.1']
    #allocation5 [shape = 's32[2]{0}', space=sflag, size = 0x8, scoped, tag = 'scoped memory for tpu_custom_call.1']
    #allocation6 [shape = 'u8[32768]{0}', space=vmem, size = 0x8000, scoped, tag = 'input window, operand 1, single buffered']
    #allocation7 [shape = 's32[1]{0}', space=sflag, size = 0x4, scoped, tag = 'scoped memory for tpu_custom_call.1']
    #allocation8 [shape = 'u8[8192]{0}', space=vmem, size = 0x2000, scoped, tag = 'input window, operand 3, single buffered']
    #allocation9 [shape = 'u8[32768]{0}', space=vmem, size = 0x8000, scoped, tag = 'input window, operand 5, single buffered']
    #allocation10 [shape = 's32[1]{0}', space=sflag, size = 0x4, scoped, tag = 'scoped memory for tpu_custom_call.1']
    #allocation11 [shape = 'u8[262144]{0}', space=vmem, size = 0x40000, scoped, tag = 'output window, operand 0']
    %12 = vsyncpa [#allocation4], 0
    %s13 = scalar_lea.sflag [#allocation4], 1
    %14 = vsyncpa %s13, 0
    %15 = vsyncpa [#allocation7], 0
    %16 = vsyncpa [#allocation10], 0
    %17 = vsyncpa [#allocation5], 0
    %s18 = scalar_lea.sflag [#allocation5], 1
    %19 = vsyncpa %s18, 0
    loop: start=0, step=1, limit=4
    $region2: #{tpu_custom_call.1} parent=1 // loop_pre_header
      _
    $region3: #{tpu_custom_call.1} parent=1 // loop_header
      %s21 = sphi 0, %s25
      %p22 = scmp.ge.s32.totalorder %s21, 4
      %s31 = sphi 0, %s33
      %s34 = sphi 0, %s31
      %s35 = sphi 0, %s34
      %s51 = sphi 0, %s35
      %s55 = sphi 0, %s55
      %s57 = sphi 0, %s55
      %s58 = sphi 0, %s57
      %s72 = sphi 0, %s58
      %s76 = sphi 0, %s76
      %s78 = sphi 0, %s76
      %s79 = sphi 0, %s78
      %s93 = sphi 0, %s79
      %s97 = sphi 0, %s97
      %s99 = sphi 0, %s97
      %s100 = sphi 0, %s99
      %s114 = sphi 0, %s100
      %s118 = sphi 0, %s118
      %s120 = sphi 0, %s118
      %s121 = sphi 0, %s120
      %s135 = sphi 0, %s121
      %s139 = sphi 0, %s139
      %s141 = sphi 0, %s139
      %s142 = sphi 0, %s141
      %s156 = sphi 0, %s142
      %s160 = sphi 0, %s160
      %s162 = sphi 0, %s160
      %s163 = sphi 0, %s162
      %s177 = sphi 0, %s163
      %s183 = sphi 0, %s185
      %s186 = sphi 0, %s183
      %s187 = sphi 0, %s186
      %s203 = sphi 0, %s187
    $region4: #{tpu_custom_call.1} parent=1 // loop_header_branch
      %24 = sbr.rel (%p22) target = $region8
    $region5: #{tpu_custom_call.1} parent=1 // loop_body
      %s26 = ssub.s32 %s21, 1
      %s27 = ssub.s32 %s21, 2
      %s28 = sadd.s32 %s21, 1
      %s29 = ssub.s32 %s21, %s28
      %p30 = scmp.eq.s32.totalorder %s29, 0
      %s32 = sadd.s32 %s31, 1
      %s33 = scalar_select %p30, %s31, %s32
      %p36 = pneg %p30
      %p37 = scmp.eq.s32.totalorder %s21, 1
      %p38 = por %p36, %p37
      %p39 = scmp.ne.s32.totalorder %s31, %s34
      %p40 = scmp.eq.s32.totalorder %s21, 0
      %p41 = por %p39, %p40
      %p42 = scmp.ne.s32.totalorder %s31, %s34
      %p43 = scmp.eq.s32.totalorder %s26, 1
      %p44 = por %p42, %p43
      %p45 = scmp.ne.s32.totalorder %s34, %s35
      %p46 = scmp.eq.s32.totalorder %s26, 0
      %p47 = por %p45, %p46
      %p48 = scmp.ne.s32.totalorder %s34, %s35
      %p49 = scmp.eq.s32.totalorder %s27, 1
      %p50 = por %p48, %p49
      %p52 = scmp.ne.s32.totalorder %s35, %s51
      %p53 = scmp.eq.s32.totalorder %s27, 0
      %p54 = por %p52, %p53
      %s56 = sadd.s32 %s55, 1
      %p59 = scmp.eq.s32.totalorder %s21, 1
      %p60 = scmp.ne.s32.totalorder %s55, %s57
      %p61 = scmp.eq.s32.totalorder %s21, 0
      %p62 = por %p60, %p61
      %p63 = scmp.ne.s32.totalorder %s55, %s57
      %p64 = scmp.eq.s32.totalorder %s26, 1
      %p65 = por %p63, %p64
      %p66 = scmp.ne.s32.totalorder %s57, %s58
      %p67 = scmp.eq.s32.totalorder %s26, 0
      %p68 = por %p66, %p67
      %p69 = scmp.ne.s32.totalorder %s57, %s58
      %p70 = scmp.eq.s32.totalorder %s27, 1
      %p71 = por %p69, %p70
      %p73 = scmp.ne.s32.totalorder %s58, %s72
      %p74 = scmp.eq.s32.totalorder %s27, 0
      %p75 = por %p73, %p74
      %s77 = sadd.s32 %s76, 1
      %p80 = scmp.eq.s32.totalorder %s21, 1
      %p81 = scmp.ne.s32.totalorder %s76, %s78
      %p82 = scmp.eq.s32.totalorder %s21, 0
      %p83 = por %p81, %p82
      %p84 = scmp.ne.s32.totalorder %s76, %s78
      %p85 = scmp.eq.s32.totalorder %s26, 1
      %p86 = por %p84, %p85
      %p87 = scmp.ne.s32.totalorder %s78, %s79
      %p88 = scmp.eq.s32.totalorder %s26, 0
      %p89 = por %p87, %p88
      %p90 = scmp.ne.s32.totalorder %s78, %s79
      %p91 = scmp.eq.s32.totalorder %s27, 1
      %p92 = por %p90, %p91
      %p94 = scmp.ne.s32.totalorder %s79, %s93
      %p95 = scmp.eq.s32.totalorder %s27, 0
      %p96 = por %p94, %p95
      %s98 = sadd.s32 %s97, 1
      %p101 = scmp.eq.s32.totalorder %s21, 1
      %p102 = scmp.ne.s32.totalorder %s97, %s99
      %p103 = scmp.eq.s32.totalorder %s21, 0
      %p104 = por %p102, %p103
      %p105 = scmp.ne.s32.totalorder %s97, %s99
      %p106 = scmp.eq.s32.totalorder %s26, 1
      %p107 = por %p105, %p106
      %p108 = scmp.ne.s32.totalorder %s99, %s100
      %p109 = scmp.eq.s32.totalorder %s26, 0
      %p110 = por %p108, %p109
      %p111 = scmp.ne.s32.totalorder %s99, %s100
      %p112 = scmp.eq.s32.totalorder %s27, 1
      %p113 = por %p111, %p112
      %p115 = scmp.ne.s32.totalorder %s100, %s114
      %p116 = scmp.eq.s32.totalorder %s27, 0
      %p117 = por %p115, %p116
      %s119 = sadd.s32 %s118, 1
      %p122 = scmp.eq.s32.totalorder %s21, 1
      %p123 = scmp.ne.s32.totalorder %s118, %s120
      %p124 = scmp.eq.s32.totalorder %s21, 0
      %p125 = por %p123, %p124
      %p126 = scmp.ne.s32.totalorder %s118, %s120
      %p127 = scmp.eq.s32.totalorder %s26, 1
      %p128 = por %p126, %p127
      %p129 = scmp.ne.s32.totalorder %s120, %s121
      %p130 = scmp.eq.s32.totalorder %s26, 0
      %p131 = por %p129, %p130
      %p132 = scmp.ne.s32.totalorder %s120, %s121
      %p133 = scmp.eq.s32.totalorder %s27, 1
      %p134 = por %p132, %p133
      %p136 = scmp.ne.s32.totalorder %s121, %s135
      %p137 = scmp.eq.s32.totalorder %s27, 0
      %p138 = por %p136, %p137
      %s140 = sadd.s32 %s139, 1
      %p143 = scmp.eq.s32.totalorder %s21, 1
      %p144 = scmp.ne.s32.totalorder %s139, %s141
      %p145 = scmp.eq.s32.totalorder %s21, 0
      %p146 = por %p144, %p145
      %p147 = scmp.ne.s32.totalorder %s139, %s141
      %p148 = scmp.eq.s32.totalorder %s26, 1
      %p149 = por %p147, %p148
      %p150 = scmp.ne.s32.totalorder %s141, %s142
      %p151 = scmp.eq.s32.totalorder %s26, 0
      %p152 = por %p150, %p151
      %p153 = scmp.ne.s32.totalorder %s141, %s142
      %p154 = scmp.eq.s32.totalorder %s27, 1
      %p155 = por %p153, %p154
      %p157 = scmp.ne.s32.totalorder %s142, %s156
      %p158 = scmp.eq.s32.totalorder %s27, 0
      %p159 = por %p157, %p158
      %s161 = sadd.s32 %s160, 1
      %p164 = scmp.eq.s32.totalorder %s21, 1
      %p165 = scmp.ne.s32.totalorder %s160, %s162
      %p166 = scmp.eq.s32.totalorder %s21, 0
      %p167 = por %p165, %p166
      %p168 = scmp.ne.s32.totalorder %s160, %s162
      %p169 = scmp.eq.s32.totalorder %s26, 1
      %p170 = por %p168, %p169
      %p171 = scmp.ne.s32.totalorder %s162, %s163
      %p172 = scmp.eq.s32.totalorder %s26, 0
      %p173 = por %p171, %p172
      %p174 = scmp.ne.s32.totalorder %s162, %s163
      %p175 = scmp.eq.s32.totalorder %s27, 1
      %p176 = por %p174, %p175
      %p178 = scmp.ne.s32.totalorder %s163, %s177
      %p179 = scmp.eq.s32.totalorder %s27, 0
      %p180 = por %p178, %p179
      %s181 = ssub.s32 %s21, %s28
      %p182 = scmp.eq.s32.totalorder %s181, 0
      %s184 = sadd.s32 %s183, 1
      %s185 = scalar_select %p182, %s183, %s184
      %p188 = pneg %p182
      %p189 = scmp.eq.s32.totalorder %s21, 1
      %p190 = por %p188, %p189
      %p191 = scmp.ne.s32.totalorder %s183, %s186
      %p192 = scmp.eq.s32.totalorder %s21, 0
      %p193 = por %p191, %p192
      %p194 = scmp.ne.s32.totalorder %s183, %s186
      %p195 = scmp.eq.s32.totalorder %s26, 1
      %p196 = por %p194, %p195
      %p197 = scmp.ne.s32.totalorder %s186, %s187
      %p198 = scmp.eq.s32.totalorder %s26, 0
      %p199 = por %p197, %p198
      %p200 = scmp.ne.s32.totalorder %s186, %s187
      %p201 = scmp.eq.s32.totalorder %s27, 1
      %p202 = por %p200, %p201
      %p204 = scmp.ne.s32.totalorder %s187, %s203
      %p205 = scmp.eq.s32.totalorder %s27, 0
      %p206 = por %p204, %p205
      %p207 = scmp.le.s32.totalorder 1, %s21
      %p208 = scmp.lt.s32.totalorder %s21, 3
      %p209 = pnand %p207, %p208
      %p210 = pneg %p209
      // Predicated region
      $region9: #{tpu_custom_call.1} parent=5 // pred_check
        _
      $region10: #{tpu_custom_call.1} parent=5 // pred_check_branch
        %212 = sbr.rel (%p209) target = $region12
      $region11: #{tpu_custom_call.1} parent=5 // pred_region
        %s213 = ssub.s32 %s21, 1
        // Predicated region
        $region13: #{tpu_custom_call.1} parent=11 // pred_check
          %p214 = pneg %p68
        $region14: #{tpu_custom_call.1} parent=11 // pred_check_branch
          %216 = sbr.rel (%p214) target = $region16
        $region15: #{tpu_custom_call.1} parent=11 // pred_region
          %s218 = ssub.s32 1024, 1024
          %219 = vsyncadd [#allocation7], %s218
          %s220 = sshll.u32 [#allocation6], 4
          %s221 = int_to_ptr.vmem [resolvable:$true] %s220
          %226 = dma.hbm_to_vmem [thread:$0]  %s1, 1024, %s221, [#allocation7], 64, 64, 4
        $region16: #{tpu_custom_call.1} parent=11 // pred_fallthru
          _
        // Predicated region
        $region17: #{tpu_custom_call.1} parent=11 // pred_check
          %p227 = pneg %p89
        $region18: #{tpu_custom_call.1} parent=11 // pred_check_branch
          %229 = sbr.rel (%p227) target = $region20
        $region19: #{tpu_custom_call.1} parent=11 // pred_region
          _
        $region20: #{tpu_custom_call.1} parent=11 // pred_fallthru
          _
        // Predicated region
        $region21: #{tpu_custom_call.1} parent=11 // pred_check
          %p230 = pneg %p110
        $region22: #{tpu_custom_call.1} parent=11 // pred_check_branch
          %232 = sbr.rel (%p230) target = $region24
        $region23: #{tpu_custom_call.1} parent=11 // pred_region
          %s234 = ssub.s32 256, 256
          %235 = vsyncadd [#allocation7], %s234
          %s236 = sshll.u32 [#allocation8], 4
          %s237 = int_to_ptr.vmem [resolvable:$true] %s236
          %242 = dma.hbm_to_vmem [thread:$0]  %s3, 256, %s237, [#allocation7], 128, 128, 8
        $region24: #{tpu_custom_call.1} parent=11 // pred_fallthru
          _
        // Predicated region
        $region25: #{tpu_custom_call.1} parent=11 // pred_check
          %p243 = pneg %p131
        $region26: #{tpu_custom_call.1} parent=11 // pred_check_branch
          %245 = sbr.rel (%p243) target = $region28
        $region27: #{tpu_custom_call.1} parent=11 // pred_region
          _
        $region28: #{tpu_custom_call.1} parent=11 // pred_fallthru
          _
        // Predicated region
        $region29: #{tpu_custom_call.1} parent=11 // pred_check
          %p246 = pneg %p152
        $region30: #{tpu_custom_call.1} parent=11 // pred_check_branch
          %248 = sbr.rel (%p246) target = $region32
        $region31: #{tpu_custom_call.1} parent=11 // pred_region
          %s250 = ssub.s32 1024, 1024
          %251 = vsyncadd [#allocation10], %s250
          %s252 = sshll.u32 [#allocation9], 4
          %s253 = int_to_ptr.vmem [resolvable:$true] %s252
          %258 = dma.hbm_to_vmem [thread:$0]  %s5, 1024, %s253, [#allocation10], 64, 64, 4
        $region32: #{tpu_custom_call.1} parent=11 // pred_fallthru
          _
        // Predicated region
        $region33: #{tpu_custom_call.1} parent=11 // pred_check
          %p259 = pneg %p173
        $region34: #{tpu_custom_call.1} parent=11 // pred_check_branch
          %261 = sbr.rel (%p259) target = $region36
        $region35: #{tpu_custom_call.1} parent=11 // pred_region
          _
        $region36: #{tpu_custom_call.1} parent=11 // pred_fallthru
          _
      $region12: #{tpu_custom_call.1} parent=5 // pred_fallthru
        _
      %p262 = scmp.lt.s32.totalorder %s21, 2
      // Predicated region
      $region37: #{tpu_custom_call.1} parent=5 // pred_check
        %p263 = pneg %p262
      $region38: #{tpu_custom_call.1} parent=5 // pred_check_branch
        %265 = sbr.rel (%p263) target = $region40
      $region39: #{tpu_custom_call.1} parent=5 // pred_region
        // Predicated region
        $region41: #{tpu_custom_call.1} parent=39 // pred_check
          %p266 = pneg %p41
        $region42: #{tpu_custom_call.1} parent=39 // pred_check_branch
          %268 = sbr.rel (%p266) target = $region44
        $region43: #{tpu_custom_call.1} parent=39 // pred_region
          %s269 = sand.u32 %s31, 1
          %s270 = scalar_lea.sflag [#allocation4], %s269
          %s271 = sand.u32 %s31, 1
          %s272 = smul.addr %s271, 256
          %s273 = scalar_lea.vmem [#allocation3], %s272
          %s275 = ssub.s32 4096, 4096
          %276 = vsyncadd %s270, %s275
          %s277 = smul.addr %s21, 32
          %s278 = smul.addr %s277, 128
          %s279 = scalar_lea.hbm %s0, %s278
          %s280 = sshll.u32 %s273, 4
          %s281 = int_to_ptr.vmem [resolvable:$true] %s280
          %286 = dma.hbm_to_vmem [thread:$0]  %s279, 4096, %s281, %s270, 128, 128, 8
        $region44: #{tpu_custom_call.1} parent=39 // pred_fallthru
          _
      $region40: #{tpu_custom_call.1} parent=5 // pred_fallthru
        _
      %p287 = scmp.le.s32.totalorder 1, %s21
      %p288 = scmp.lt.s32.totalorder %s21, 3
      %p289 = pnand %p287, %p288
      %p290 = pneg %p289
      // Predicated region
      $region45: #{tpu_custom_call.1} parent=5 // pred_check
        _
      $region46: #{tpu_custom_call.1} parent=5 // pred_check_branch
        %292 = sbr.rel (%p289) target = $region48
      $region47: #{tpu_custom_call.1} parent=5 // pred_region
        %s293 = ssub.s32 %s21, 1
        %s294 = sand.u32 %s34, 1
        %s295 = scalar_lea.sflag [#allocation4], %s294
        %s296 = sand.u32 %s34, 1
        %s297 = smul.addr %s296, 256
        %s298 = scalar_lea.vmem [#allocation3], %s297
        // Predicated region
        $region49: #{tpu_custom_call.1} parent=47 // pred_check
          %p299 = pneg %p47
        $region50: #{tpu_custom_call.1} parent=47 // pred_check_branch
          %301 = sbr.rel (%p299) target = $region52
        $region51: #{tpu_custom_call.1} parent=47 // pred_region
          %302 = dma.done %s295, 4096
        $region52: #{tpu_custom_call.1} parent=47 // pred_fallthru
          _
        // Predicated region
        $region53: #{tpu_custom_call.1} parent=47 // pred_check
          %p303 = pneg %p68
        $region54: #{tpu_custom_call.1} parent=47 // pred_check_branch
          %305 = sbr.rel (%p303) target = $region56
        $region55: #{tpu_custom_call.1} parent=47 // pred_region
          %306 = dma.done [#allocation7], 1024
        $region56: #{tpu_custom_call.1} parent=47 // pred_fallthru
          _
        // Predicated region
        $region57: #{tpu_custom_call.1} parent=47 // pred_check
          %p307 = pneg %p110
        $region58: #{tpu_custom_call.1} parent=47 // pred_check_branch
          %309 = sbr.rel (%p307) target = $region60
        $region59: #{tpu_custom_call.1} parent=47 // pred_region
          %310 = dma.done [#allocation7], 256
        $region60: #{tpu_custom_call.1} parent=47 // pred_fallthru
          _
        // Predicated region
        $region61: #{tpu_custom_call.1} parent=47 // pred_check
          %p311 = pneg %p152
        $region62: #{tpu_custom_call.1} parent=47 // pred_check_branch
          %313 = sbr.rel (%p311) target = $region64
        $region63: #{tpu_custom_call.1} parent=47 // pred_region
          %314 = dma.done [#allocation10], 1024
        $region64: #{tpu_custom_call.1} parent=47 // pred_fallthru
          _
        %s315 = sand.u32 %s34, 1
        %s316 = scalar_lea.sflag [#allocation4], %s315
        %s317 = sand.u32 %s34, 1
        %s318 = smul.addr %s317, 256
        %s319 = scalar_lea.vmem [#allocation3], %s318
        %p320 = pneg %p47
        %p321 = pneg %p44
        %p322 = pneg %p68
        %p323 = pneg %p65
        %p324 = pneg %p89
        %p325 = pneg %p86
        %p326 = pneg %p110
        %p327 = pneg %p107
        %p328 = pneg %p131
        %p329 = pneg %p128
        %p330 = pneg %p152
        %p331 = pneg %p149
        %p332 = pneg %p173
        %p333 = pneg %p170
        %p334 = pneg %p199
        %p335 = pneg %p196
        %s336 = sand.u32 %s186, 1
        %s337 = scalar_lea.sflag [#allocation5], %s336
        %s338 = sand.u32 %s186, 1
        %s339 = smul.addr %s338, 256
        %s340 = scalar_lea.vmem [#allocation11], %s339
        %342 = vst [vmem:[#allocation2] sm:$0xff] 0.0
        %343 = vst [vmem:[#allocation2 + $0x8] sm:$0xff] 0.0
        %344 = vst [vmem:[#allocation2 + $0x10] sm:$0x3] 0.0
        %345 = vst [vmem:[#allocation2 + $0x18] sm:$0xff] 0.0
        %346 = vst [vmem:[#allocation2 + $0x20] sm:$0xff] 0.0
        %347 = vst [vmem:[#allocation2 + $0x28] sm:$0x3] 0.0
        %348 = vst [vmem:[#allocation2 + $0x30] sm:$0xff] 0.0
        %349 = vst [vmem:[#allocation2 + $0x38] sm:$0xff] 0.0
        %350 = vst [vmem:[#allocation2 + $0x40] sm:$0x3] 0.0
        %351 = vst [vmem:[#allocation2 + $0x48] sm:$0xff] 0.0
        %352 = vst [vmem:[#allocation2 + $0x50] sm:$0xff] 0.0
        %353 = vst [vmem:[#allocation2 + $0x58] sm:$0x3] 0.0
        %354 = vst [vmem:[#allocation2 + $0x60] sm:$0xff] 0.0
        %355 = vst [vmem:[#allocation2 + $0x68] sm:$0xff] 0.0
        %356 = vst [vmem:[#allocation2 + $0x70] sm:$0x3] 0.0
        %357 = vst [vmem:[#allocation2 + $0x78] sm:$0xff] 0.0
        %358 = vst [vmem:[#allocation2 + $0x80] sm:$0xff] 0.0
        %359 = vst [vmem:[#allocation2 + $0x88] sm:$0x3] 0.0
        %360 = vst [vmem:[#allocation2 + $0x90] sm:$0xff] 0.0
        %361 = vst [vmem:[#allocation2 + $0x98] sm:$0xff] 0.0
        %362 = vst [vmem:[#allocation2 + $0xa0] sm:$0x3] 0.0
        %363 = vst [vmem:[#allocation2 + $0xa8] sm:$0xff] 0.0
        %364 = vst [vmem:[#allocation2 + $0xb0] sm:$0xff] 0.0
        %365 = vst [vmem:[#allocation2 + $0xb8] sm:$0x3] 0.0
        %366 = vst [vmem:[#allocation2 + $0xc0] sm:$0xff] 0.0
        %367 = vst [vmem:[#allocation2 + $0xc8] sm:$0xff] 0.0
        %368 = vst [vmem:[#allocation2 + $0xd0] sm:$0x3] 0.0
        %369 = vst [vmem:[#allocation2 + $0xd8] sm:$0xff] 0.0
        %370 = vst [vmem:[#allocation2 + $0xe0] sm:$0xff] 0.0
        %371 = vst [vmem:[#allocation2 + $0xe8] sm:$0x3] 0.0
        %372 = vst [vmem:[#allocation2 + $0xf0] sm:$0xff] 0.0
        %373 = vst [vmem:[#allocation2 + $0xf8] sm:$0xff] 0.0
        %374 = vst [vmem:[#allocation2 + $0x100] sm:$0x3] 0.0
        %375 = vst [vmem:[#allocation2 + $0x108] sm:$0xff] 0.0
        %376 = vst [vmem:[#allocation2 + $0x110] sm:$0xff] 0.0
        %377 = vst [vmem:[#allocation2 + $0x118] sm:$0x3] 0.0
        %378 = vst [vmem:[#allocation2 + $0x120] sm:$0xff] 0.0
        %379 = vst [vmem:[#allocation2 + $0x128] sm:$0xff] 0.0
        %380 = vst [vmem:[#allocation2 + $0x130] sm:$0x3] 0.0
        %381 = vst [vmem:[#allocation2 + $0x138] sm:$0xff] 0.0
        %382 = vst [vmem:[#allocation2 + $0x140] sm:$0xff] 0.0
        %383 = vst [vmem:[#allocation2 + $0x148] sm:$0x3] 0.0
        %384 = vst [vmem:[#allocation2 + $0x150] sm:$0xff] 0.0
        %385 = vst [vmem:[#allocation2 + $0x158] sm:$0xff] 0.0
        %386 = vst [vmem:[#allocation2 + $0x160] sm:$0x3] 0.0
        %387 = vst [vmem:[#allocation2 + $0x168] sm:$0xff] 0.0
        %388 = vst [vmem:[#allocation2 + $0x170] sm:$0xff] 0.0
        %389 = vst [vmem:[#allocation2 + $0x178] sm:$0x3] 0.0
        %390 = vst [vmem:[#allocation2 + $0x180] sm:$0xff] 0.0
        %391 = vst [vmem:[#allocation2 + $0x188] sm:$0xff] 0.0
        %392 = vst [vmem:[#allocation2 + $0x190] sm:$0x3] 0.0
        %393 = vst [vmem:[#allocation2 + $0x198] sm:$0xff] 0.0
        %394 = vst [vmem:[#allocation2 + $0x1a0] sm:$0xff] 0.0
        %395 = vst [vmem:[#allocation2 + $0x1a8] sm:$0x3] 0.0
        %v396 = vld [vmem:[%s298] sm:$0xff]
        %v397 = vld [vmem:[%s298 + $0x8] sm:$0xff]
        %v398 = vld [vmem:[%s298 + $0x10] sm:$0xff]
        %v399 = vld [vmem:[%s298 + $0x18] sm:$0xff]
        %v400 = vld [vmem:[%s298 + $0x20] sm:$0xff]
        %v401 = vld [vmem:[%s298 + $0x28] sm:$0xff]
        %v402 = vld [vmem:[%s298 + $0x30] sm:$0xff]
        %v403 = vld [vmem:[%s298 + $0x38] sm:$0xff]
        %v404 = vld [vmem:[%s298 + $0x40] sm:$0xff]
        %v405 = vld [vmem:[%s298 + $0x48] sm:$0xff]
        %v406 = vld [vmem:[%s298 + $0x50] sm:$0xff]
        %v407 = vld [vmem:[%s298 + $0x58] sm:$0xff]
        %v408 = vld [vmem:[%s298 + $0x60] sm:$0xff]
        %v409 = vld [vmem:[%s298 + $0x68] sm:$0xff]
        %v410 = vld [vmem:[%s298 + $0x70] sm:$0xff]
        %v411 = vld [vmem:[%s298 + $0x78] sm:$0xff]
        %v412 = vld [vmem:[%s298 + $0x80] sm:$0xff]
        %v413 = vld [vmem:[%s298 + $0x88] sm:$0xff]
        %v414 = vld [vmem:[%s298 + $0x90] sm:$0xff]
        %v415 = vld [vmem:[%s298 + $0x98] sm:$0xff]
        %v416 = vld [vmem:[%s298 + $0xa0] sm:$0xff]
        %v417 = vld [vmem:[%s298 + $0xa8] sm:$0xff]
        %v418 = vld [vmem:[%s298 + $0xb0] sm:$0xff]
        %v419 = vld [vmem:[%s298 + $0xb8] sm:$0xff]
        %v420 = vld [vmem:[%s298 + $0xc0] sm:$0xff]
        %v421 = vld [vmem:[%s298 + $0xc8] sm:$0xff]
        %v422 = vld [vmem:[%s298 + $0xd0] sm:$0xff]
        %v423 = vld [vmem:[%s298 + $0xd8] sm:$0xff]
        %v424 = vld [vmem:[%s298 + $0xe0] sm:$0xff]
        %v425 = vld [vmem:[%s298 + $0xe8] sm:$0xff]
        %v426 = vld [vmem:[%s298 + $0xf0] sm:$0xff]
        %v427 = vld [vmem:[%s298 + $0xf8] sm:$0xff]
        %v428 = vpack.c.bf16 %v397, %v396
        %v429 = vpack.c.bf16 %v399, %v398
        %v430 = vpack.c.bf16 %v401, %v400
        %v431 = vpack.c.bf16 %v403, %v402
        %v432 = vpack.c.bf16 %v405, %v404
        %v433 = vpack.c.bf16 %v407, %v406
        %v434 = vpack.c.bf16 %v409, %v408
        %v435 = vpack.c.bf16 %v411, %v410
        %v436 = vpack.c.bf16 %v413, %v412
        %v437 = vpack.c.bf16 %v415, %v414
        %v438 = vpack.c.bf16 %v417, %v416
        %v439 = vpack.c.bf16 %v419, %v418
        %v440 = vpack.c.bf16 %v421, %v420
        %v441 = vpack.c.bf16 %v423, %v422
        %v442 = vpack.c.bf16 %v425, %v424
        %v443 = vpack.c.bf16 %v427, %v426
        %v444 = vld [vmem:[#allocation6] sm:$0xf]
        %v445 = vld [vmem:[#allocation6 + $0x4] sm:$0xf]
        %v446 = vld [vmem:[#allocation6 + $0x8] sm:$0xf]
        %v447 = vld [vmem:[#allocation6 + $0xc] sm:$0xf]
        %v448 = vld [vmem:[#allocation6 + $0x10] sm:$0xf]
        %v449 = vld [vmem:[#allocation6 + $0x14] sm:$0xf]
        %v450 = vld [vmem:[#allocation6 + $0x18] sm:$0xf]
        %v451 = vld [vmem:[#allocation6 + $0x1c] sm:$0xf]
        %v452 = vld [vmem:[#allocation6 + $0x20] sm:$0xf]
        %v453 = vld [vmem:[#allocation6 + $0x24] sm:$0xf]
        %v454 = vld [vmem:[#allocation6 + $0x28] sm:$0xf]
        %v455 = vld [vmem:[#allocation6 + $0x2c] sm:$0xf]
        %v456 = vld [vmem:[#allocation6 + $0x30] sm:$0xf]
        %v457 = vld [vmem:[#allocation6 + $0x34] sm:$0xf]
        %v458 = vld [vmem:[#allocation6 + $0x38] sm:$0xf]
        %v459 = vld [vmem:[#allocation6 + $0x3c] sm:$0xf]
        %v460 = vld [vmem:[%s2] sm:$0x1]
        %v462 = vlaneseq
        %v463 = vshrl.u32 %v462, 7
        %v464 = vsub.s32 0, %v463
        %v465 = vrot.slane %v460, %v464
        %v483 = vunpack.c.l.b16 %v444
        %v484 = vunpack.c.l.b16 %v445
        %v485 = vunpack.c.l.b16 %v446
        %v486 = vunpack.c.l.b16 %v447
        %v487 = vunpack.c.l.b16 %v448
        %v488 = vunpack.c.l.b16 %v449
        %v489 = vunpack.c.l.b16 %v450
        %v490 = vunpack.c.l.b16 %v451
        %v491 = vunpack.c.l.b16 %v452
        %v492 = vunpack.c.l.b16 %v453
        %v493 = vunpack.c.l.b16 %v454
        %v494 = vunpack.c.l.b16 %v455
        %v495 = vunpack.c.l.b16 %v456
        %v496 = vunpack.c.l.b16 %v457
        %v497 = vunpack.c.l.b16 %v458
        %v498 = vunpack.c.l.b16 %v459
        %v499 = vpack.c.b16 %v484, %v483
        %v500 = vpack.c.b16 %v486, %v485
        %v501 = vpack.c.b16 %v488, %v487
        %v502 = vpack.c.b16 %v490, %v489
        %v503 = vpack.c.b16 %v492, %v491
        %v504 = vpack.c.b16 %v494, %v493
        %v505 = vpack.c.b16 %v496, %v495
        %v506 = vpack.c.b16 %v498, %v497
        %515 = vmatprep.subr.bf16.mxu0 0
        %516 = vmatpush1.bf16.msra.mxu0 %v499
        %517 = vmatprep.subr.bf16.mxu0 0
        %518 = vmatpush1.bf16.msra.mxu0 %v500
        %519 = vmatprep.subr.bf16.mxu0 0
        %520 = vmatpush1.bf16.msra.mxu0 %v501
        %521 = vmatprep.subr.bf16.mxu0 0
        %522 = vmatpush1.bf16.msra.mxu0 %v502
        %523 = vmatprep.subr.bf16.mxu0 0
        %524 = vmatpush1.bf16.msra.mxu0 %v503
        %525 = vmatprep.subr.bf16.mxu0 0
        %526 = vmatpush1.bf16.msra.mxu0 %v504
        %527 = vmatprep.subr.bf16.mxu0 0
        %528 = vmatpush1.bf16.msra.mxu0 %v505
        %529 = vmatprep.subr.bf16.mxu0 0
        %530 = vmatpush1.bf16.msra.mxu0 %v506
        %531 = vmatprep.subr.bf16.mxu0 0
        %532 = vmatpush1.bf16.msra.mxu0 0
        %533 = vmatprep.subr.bf16.mxu0 0
        %534 = vmatpush1.bf16.msra.mxu0 0
        %535 = vmatprep.subr.bf16.mxu0 0
        %536 = vmatpush1.bf16.msra.mxu0 0
        %537 = vmatprep.subr.bf16.mxu0 0
        %538 = vmatpush1.bf16.msra.mxu0 0
        %539 = vmatprep.subr.bf16.mxu0 0
        %540 = vmatpush1.bf16.msra.mxu0 0
        %541 = vmatprep.subr.bf16.mxu0 0
        %542 = vmatpush1.bf16.msra.mxu0 0
        %543 = vmatprep.subr.bf16.mxu0 0
        %544 = vmatpush1.bf16.msra.mxu0 0
        %545 = vmatprep.subr.bf16.mxu0 0
        %546 = vmatpush1.bf16.msra.mxu0 0
        %547 = vmatprep.mubr.bf16.mxu0 0
        %548 = vmatmul.mubr.bf16.gmra.mrb[0].mxu0 %v428
        %v549 = vpop.f32.mrb[0].mxu0
        %v550 = vadd.f32 %v465, %v549
        %v551 = vpop.f32.mrb[0].mxu0
        %v552 = vpop.f32.mrb[0].mxu0
        %v553 = vadd.f32 %v465, %v552
        %v554 = vpop.f32.mrb[0].mxu0
        %555 = vmatprep.mubr.bf16.mxu0 0
        %556 = vmatmul.mubr.bf16.gmra.mrb[0].mxu0 %v429
        %v557 = vpop.f32.mrb[0].mxu0
        %v558 = vadd.f32 %v465, %v557
        %v559 = vpop.f32.mrb[0].mxu0
        %v560 = vpop.f32.mrb[0].mxu0
        %v561 = vadd.f32 %v465, %v560
        %v562 = vpop.f32.mrb[0].mxu0
        %563 = vmatprep.mubr.bf16.mxu0 0
        %564 = vmatmul.mubr.bf16.gmra.mrb[0].mxu0 %v430
        %v565 = vpop.f32.mrb[0].mxu0
        %v566 = vadd.f32 %v465, %v565
        %v567 = vpop.f32.mrb[0].mxu0
        %v568 = vpop.f32.mrb[0].mxu0
        %v569 = vadd.f32 %v465, %v568
        %v570 = vpop.f32.mrb[0].mxu0
        %571 = vmatprep.mubr.bf16.mxu0 0
        %572 = vmatmul.mubr.bf16.gmra.mrb[0].mxu0 %v431
        %v573 = vpop.f32.mrb[0].mxu0
        %v574 = vadd.f32 %v465, %v573
        %v575 = vpop.f32.mrb[0].mxu0
        %v576 = vpop.f32.mrb[0].mxu0
        %v577 = vadd.f32 %v465, %v576
        %v578 = vpop.f32.mrb[0].mxu0
        %579 = vmatprep.mubr.bf16.mxu0 0
        %580 = vmatmul.mubr.bf16.gmra.mrb[0].mxu0 %v432
        %v581 = vpop.f32.mrb[0].mxu0
        %v582 = vadd.f32 %v465, %v581
        %v583 = vpop.f32.mrb[0].mxu0
        %v584 = vpop.f32.mrb[0].mxu0
        %v585 = vadd.f32 %v465, %v584
        %v586 = vpop.f32.mrb[0].mxu0
        %587 = vmatprep.mubr.bf16.mxu0 0
        %588 = vmatmul.mubr.bf16.gmra.mrb[0].mxu0 %v433
        %v589 = vpop.f32.mrb[0].mxu0
        %v590 = vadd.f32 %v465, %v589
        %v591 = vpop.f32.mrb[0].mxu0
        %v592 = vpop.f32.mrb[0].mxu0
        %v593 = vadd.f32 %v465, %v592
        %v594 = vpop.f32.mrb[0].mxu0
        %595 = vmatprep.mubr.bf16.mxu0 0
        %596 = vmatmul.mubr.bf16.gmra.mrb[0].mxu0 %v434
        %v597 = vpop.f32.mrb[0].mxu0
        %v598 = vadd.f32 %v465, %v597
        %v599 = vpop.f32.mrb[0].mxu0
        %v600 = vpop.f32.mrb[0].mxu0
        %v601 = vadd.f32 %v465, %v600
        %v602 = vpop.f32.mrb[0].mxu0
        %603 = vmatprep.mubr.bf16.mxu0 0
        %604 = vmatmul.mubr.bf16.gmra.mrb[0].mxu0 %v435
        %v605 = vpop.f32.mrb[0].mxu0
        %v606 = vadd.f32 %v465, %v605
        %v607 = vpop.f32.mrb[0].mxu0
        %v608 = vpop.f32.mrb[0].mxu0
        %v609 = vadd.f32 %v465, %v608
        %v610 = vpop.f32.mrb[0].mxu0
        %611 = vmatprep.mubr.bf16.mxu0 0
        %612 = vmatmul.mubr.bf16.gmra.mrb[0].mxu0 %v436
        %v613 = vpop.f32.mrb[0].mxu0
        %v614 = vadd.f32 %v465, %v613
        %v615 = vpop.f32.mrb[0].mxu0
        %v616 = vpop.f32.mrb[0].mxu0
        %v617 = vadd.f32 %v465, %v616
        %v618 = vpop.f32.mrb[0].mxu0
        %619 = vmatprep.mubr.bf16.mxu0 0
        %620 = vmatmul.mubr.bf16.gmra.mrb[0].mxu0 %v437
        %v621 = vpop.f32.mrb[0].mxu0
        %v622 = vadd.f32 %v465, %v621
        %v623 = vpop.f32.mrb[0].mxu0
        %v624 = vpop.f32.mrb[0].mxu0
        %v625 = vadd.f32 %v465, %v624
        %v626 = vpop.f32.mrb[0].mxu0
        %627 = vmatprep.mubr.bf16.mxu0 0
        %628 = vmatmul.mubr.bf16.gmra.mrb[0].mxu0 %v438
        %v629 = vpop.f32.mrb[0].mxu0
        %v630 = vadd.f32 %v465, %v629
        %v631 = vpop.f32.mrb[0].mxu0
        %v632 = vpop.f32.mrb[0].mxu0
        %v633 = vadd.f32 %v465, %v632
        %v634 = vpop.f32.mrb[0].mxu0
        %635 = vmatprep.mubr.bf16.mxu0 0
        %636 = vmatmul.mubr.bf16.gmra.mrb[0].mxu0 %v439
        %v637 = vpop.f32.mrb[0].mxu0
        %v638 = vadd.f32 %v465, %v637
        %v639 = vpop.f32.mrb[0].mxu0
        %v640 = vpop.f32.mrb[0].mxu0
        %v641 = vadd.f32 %v465, %v640
        %v642 = vpop.f32.mrb[0].mxu0
        %643 = vmatprep.mubr.bf16.mxu0 0
        %644 = vmatmul.mubr.bf16.gmra.mrb[0].mxu0 %v440
        %v645 = vpop.f32.mrb[0].mxu0
        %v646 = vadd.f32 %v465, %v645
        %v647 = vpop.f32.mrb[0].mxu0
        %v648 = vpop.f32.mrb[0].mxu0
        %v649 = vadd.f32 %v465, %v648
        %v650 = vpop.f32.mrb[0].mxu0
        %651 = vmatprep.mubr.bf16.mxu0 0
        %652 = vmatmul.mubr.bf16.gmra.mrb[0].mxu0 %v441
        %v653 = vpop.f32.mrb[0].mxu0
        %v654 = vadd.f32 %v465, %v653
        %v655 = vpop.f32.mrb[0].mxu0
        %v656 = vpop.f32.mrb[0].mxu0
        %v657 = vadd.f32 %v465, %v656
        %v658 = vpop.f32.mrb[0].mxu0
        %659 = vmatprep.mubr.bf16.mxu0 0
        %660 = vmatmul.mubr.bf16.gmra.mrb[0].mxu0 %v442
        %v661 = vpop.f32.mrb[0].mxu0
        %v662 = vadd.f32 %v465, %v661
        %v663 = vpop.f32.mrb[0].mxu0
        %v664 = vpop.f32.mrb[0].mxu0
        %v665 = vadd.f32 %v465, %v664
        %v666 = vpop.f32.mrb[0].mxu0
        %667 = vmatprep.mubr.bf16.mxu0 0
        %668 = vmatmul.mubr.bf16.gmra.mrb[0].mxu0 %v443
        %v669 = vpop.f32.mrb[0].mxu0
        %v670 = vadd.f32 %v465, %v669
        %v671 = vpop.f32.mrb[0].mxu0
        %v672 = vpop.f32.mrb[0].mxu0
        %v673 = vadd.f32 %v465, %v672
        %v674 = vpop.f32.mrb[0].mxu0
        %675 = vdwg.mxu0
        %v676 = vmax.f32 %v550, 0.0
        %v677 = vmax.f32 %v553, 0.0
        %v678 = vmax.f32 %v558, 0.0
        %v679 = vmax.f32 %v561, 0.0
        %v680 = vmax.f32 %v566, 0.0
        %v681 = vmax.f32 %v569, 0.0
        %v682 = vmax.f32 %v574, 0.0
        %v683 = vmax.f32 %v577, 0.0
        %v684 = vmax.f32 %v582, 0.0
        %v685 = vmax.f32 %v585, 0.0
        %v686 = vmax.f32 %v590, 0.0
        %v687 = vmax.f32 %v593, 0.0
        %v688 = vmax.f32 %v598, 0.0
        %v689 = vmax.f32 %v601, 0.0
        %v690 = vmax.f32 %v606, 0.0
        %v691 = vmax.f32 %v609, 0.0
        %v692 = vmax.f32 %v614, 0.0
        %v693 = vmax.f32 %v617, 0.0
        %v694 = vmax.f32 %v622, 0.0
        %v695 = vmax.f32 %v625, 0.0
        %v696 = vmax.f32 %v630, 0.0
        %v697 = vmax.f32 %v633, 0.0
        %v698 = vmax.f32 %v638, 0.0
        %v699 = vmax.f32 %v641, 0.0
        %v700 = vmax.f32 %v646, 0.0
        %v701 = vmax.f32 %v649, 0.0
        %v702 = vmax.f32 %v654, 0.0
        %v703 = vmax.f32 %v657, 0.0
        %v704 = vmax.f32 %v662, 0.0
        %v705 = vmax.f32 %v665, 0.0
        %v706 = vmax.f32 %v670, 0.0
        %v707 = vmax.f32 %v673, 0.0
        %s708 = scalar_lea.vmem [#allocation2], 24
        %709 = vst [vmem:[%s708 + $0x1] sm:$0xff] %v676
        %710 = vst [vmem:[%s708 + $0x9] sm:$0xff] %v677
        %711 = vst [vmem:[%s708 + $0x19] sm:$0xff] %v678
        %712 = vst [vmem:[%s708 + $0x21] sm:$0xff] %v679
        %713 = vst [vmem:[%s708 + $0x31] sm:$0xff] %v680
        %714 = vst [vmem:[%s708 + $0x39] sm:$0xff] %v681
        %715 = vst [vmem:[%s708 + $0x49] sm:$0xff] %v682
        %716 = vst [vmem:[%s708 + $0x51] sm:$0xff] %v683
        %717 = vst [vmem:[%s708 + $0x61] sm:$0xff] %v684
        %718 = vst [vmem:[%s708 + $0x69] sm:$0xff] %v685
        %719 = vst [vmem:[%s708 + $0x79] sm:$0xff] %v686
        %720 = vst [vmem:[%s708 + $0x81] sm:$0xff] %v687
        %721 = vst [vmem:[%s708 + $0x91] sm:$0xff] %v688
        %722 = vst [vmem:[%s708 + $0x99] sm:$0xff] %v689
        %723 = vst [vmem:[%s708 + $0xa9] sm:$0xff] %v690
        %724 = vst [vmem:[%s708 + $0xb1] sm:$0xff] %v691
        %725 = vst [vmem:[%s708 + $0xc1] sm:$0xff] %v692
        %726 = vst [vmem:[%s708 + $0xc9] sm:$0xff] %v693
        %727 = vst [vmem:[%s708 + $0xd9] sm:$0xff] %v694
        %728 = vst [vmem:[%s708 + $0xe1] sm:$0xff] %v695
        %729 = vst [vmem:[%s708 + $0xf1] sm:$0xff] %v696
        %730 = vst [vmem:[%s708 + $0xf9] sm:$0xff] %v697
        %731 = vst [vmem:[%s708 + $0x109] sm:$0xff] %v698
        %732 = vst [vmem:[%s708 + $0x111] sm:$0xff] %v699
        %733 = vst [vmem:[%s708 + $0x121] sm:$0xff] %v700
        %734 = vst [vmem:[%s708 + $0x129] sm:$0xff] %v701
        %735 = vst [vmem:[%s708 + $0x139] sm:$0xff] %v702
        %736 = vst [vmem:[%s708 + $0x141] sm:$0xff] %v703
        %737 = vst [vmem:[%s708 + $0x151] sm:$0xff] %v704
        %738 = vst [vmem:[%s708 + $0x159] sm:$0xff] %v705
        %739 = vst [vmem:[%s708 + $0x169] sm:$0xff] %v706
        %740 = vst [vmem:[%s708 + $0x171] sm:$0xff] %v707
        %v741 = vld [vmem:[#allocation2] sm:$0xff]
        %v742 = vld [vmem:[#allocation2 + $0x8] sm:$0xff]
        %v743 = vld [vmem:[#allocation2 + $0x18] sm:$0xff]
        %v744 = vld [vmem:[#allocation2 + $0x20] sm:$0xff]
        %v745 = vld [vmem:[#allocation2 + $0x30] sm:$0xff]
        %v746 = vld [vmem:[#allocation2 + $0x38] sm:$0xff]
        %v747 = vld [vmem:[#allocation2 + $0x48] sm:$0xff]
        %v748 = vld [vmem:[#allocation2 + $0x50] sm:$0xff]
        %v749 = vld [vmem:[#allocation2 + $0x60] sm:$0xff]
        %v750 = vld [vmem:[#allocation2 + $0x68] sm:$0xff]
        %v751 = vld [vmem:[#allocation2 + $0x78] sm:$0xff]
        %v752 = vld [vmem:[#allocation2 + $0x80] sm:$0xff]
        %v753 = vld [vmem:[#allocation2 + $0x90] sm:$0xff]
        %v754 = vld [vmem:[#allocation2 + $0x98] sm:$0xff]
        %v755 = vld [vmem:[#allocation2 + $0xa8] sm:$0xff]
        %v756 = vld [vmem:[#allocation2 + $0xb0] sm:$0xff]
        %v757 = vld [vmem:[#allocation2 + $0xc0] sm:$0xff]
        %v758 = vld [vmem:[#allocation2 + $0xc8] sm:$0xff]
        %v759 = vld [vmem:[#allocation2 + $0xd8] sm:$0xff]
        %v760 = vld [vmem:[#allocation2 + $0xe0] sm:$0xff]
        %v761 = vld [vmem:[#allocation2 + $0xf0] sm:$0xff]
        %v762 = vld [vmem:[#allocation2 + $0xf8] sm:$0xff]
        %v763 = vld [vmem:[#allocation2 + $0x108] sm:$0xff]
        %v764 = vld [vmem:[#allocation2 + $0x110] sm:$0xff]
        %v765 = vld [vmem:[#allocation2 + $0x120] sm:$0xff]
        %v766 = vld [vmem:[#allocation2 + $0x128] sm:$0xff]
        %v767 = vld [vmem:[#allocation2 + $0x138] sm:$0xff]
        %v768 = vld [vmem:[#allocation2 + $0x140] sm:$0xff]
        %v769 = vld [vmem:[#allocation2 + $0x150] sm:$0xff]
        %v770 = vld [vmem:[#allocation2 + $0x158] sm:$0xff]
        %v771 = vld [vmem:[#allocation2 + $0x168] sm:$0xff]
        %v772 = vld [vmem:[#allocation2 + $0x170] sm:$0xff]
        %v773 = vld [vmem:[#allocation8] sm:$0x1]
        %v774 = vlaneseq
        %v775 = vshrl.u32 %v774, 7
        %v776 = vsub.s32 0, %v775
        %v777 = vrot.slane %v773, %v776
        %v778 = vmul.f32 %v741, %v777
        %v779 = vmul.f32 %v742, %v777
        %v780 = vmul.f32 %v743, %v777
        %v781 = vmul.f32 %v744, %v777
        %v782 = vmul.f32 %v745, %v777
        %v783 = vmul.f32 %v746, %v777
        %v784 = vmul.f32 %v747, %v777
        %v785 = vmul.f32 %v748, %v777
        %v786 = vmul.f32 %v749, %v777
        %v787 = vmul.f32 %v750, %v777
        %v788 = vmul.f32 %v751, %v777
        %v789 = vmul.f32 %v752, %v777
        %v790 = vmul.f32 %v753, %v777
        %v791 = vmul.f32 %v754, %v777
        %v792 = vmul.f32 %v755, %v777
        %v793 = vmul.f32 %v756, %v777
        %v794 = vmul.f32 %v757, %v777
        %v795 = vmul.f32 %v758, %v777
        %v796 = vmul.f32 %v759, %v777
        %v797 = vmul.f32 %v760, %v777
        %v798 = vmul.f32 %v761, %v777
        %v799 = vmul.f32 %v762, %v777
        %v800 = vmul.f32 %v763, %v777
        %v801 = vmul.f32 %v764, %v777
        %v802 = vmul.f32 %v765, %v777
        %v803 = vmul.f32 %v766, %v777
        %v804 = vmul.f32 %v767, %v777
        %v805 = vmul.f32 %v768, %v777
        %v806 = vmul.f32 %v769, %v777
        %v807 = vmul.f32 %v770, %v777
        %v808 = vmul.f32 %v771, %v777
        %v809 = vmul.f32 %v772, %v777
        %v810 = vadd.f32 %v778, 0.0
        %v811 = vadd.f32 %v779, 0.0
        %v812 = vadd.f32 %v780, 0.0
        %v813 = vadd.f32 %v781, 0.0
        %v814 = vadd.f32 %v782, 0.0
        %v815 = vadd.f32 %v783, 0.0
        %v816 = vadd.f32 %v784, 0.0
        %v817 = vadd.f32 %v785, 0.0
        %v818 = vadd.f32 %v786, 0.0
        %v819 = vadd.f32 %v787, 0.0
        %v820 = vadd.f32 %v788, 0.0
        %v821 = vadd.f32 %v789, 0.0
        %v822 = vadd.f32 %v790, 0.0
        %v823 = vadd.f32 %v791, 0.0
        %v824 = vadd.f32 %v792, 0.0
        %v825 = vadd.f32 %v793, 0.0
        %v826 = vadd.f32 %v794, 0.0
        %v827 = vadd.f32 %v795, 0.0
        %v828 = vadd.f32 %v796, 0.0
        %v829 = vadd.f32 %v797, 0.0
        %v830 = vadd.f32 %v798, 0.0
        %v831 = vadd.f32 %v799, 0.0
        %v832 = vadd.f32 %v800, 0.0
        %v833 = vadd.f32 %v801, 0.0
        %v834 = vadd.f32 %v802, 0.0
        %v835 = vadd.f32 %v803, 0.0
        %v836 = vadd.f32 %v804, 0.0
        %v837 = vadd.f32 %v805, 0.0
        %v838 = vadd.f32 %v806, 0.0
        %v839 = vadd.f32 %v807, 0.0
        %v840 = vadd.f32 %v808, 0.0
        %v841 = vadd.f32 %v809, 0.0
        %v842 = vld [vmem:[#allocation2 + $0x1] sm:$0xff]
        %v843 = vld [vmem:[#allocation2 + $0x9] sm:$0xff]
        %v844 = vld [vmem:[#allocation2 + $0x19] sm:$0xff]
        %v845 = vld [vmem:[#allocation2 + $0x21] sm:$0xff]
        %v846 = vld [vmem:[#allocation2 + $0x31] sm:$0xff]
        %v847 = vld [vmem:[#allocation2 + $0x39] sm:$0xff]
        %v848 = vld [vmem:[#allocation2 + $0x49] sm:$0xff]
        %v849 = vld [vmem:[#allocation2 + $0x51] sm:$0xff]
        %v850 = vld [vmem:[#allocation2 + $0x61] sm:$0xff]
        %v851 = vld [vmem:[#allocation2 + $0x69] sm:$0xff]
        %v852 = vld [vmem:[#allocation2 + $0x79] sm:$0xff]
        %v853 = vld [vmem:[#allocation2 + $0x81] sm:$0xff]
        %v854 = vld [vmem:[#allocation2 + $0x91] sm:$0xff]
        %v855 = vld [vmem:[#allocation2 + $0x99] sm:$0xff]
        %v856 = vld [vmem:[#allocation2 + $0xa9] sm:$0xff]
        %v857 = vld [vmem:[#allocation2 + $0xb1] sm:$0xff]
        %v858 = vld [vmem:[#allocation2 + $0xc1] sm:$0xff]
        %v859 = vld [vmem:[#allocation2 + $0xc9] sm:$0xff]
        %v860 = vld [vmem:[#allocation2 + $0xd9] sm:$0xff]
        %v861 = vld [vmem:[#allocation2 + $0xe1] sm:$0xff]
        %v862 = vld [vmem:[#allocation2 + $0xf1] sm:$0xff]
        %v863 = vld [vmem:[#allocation2 + $0xf9] sm:$0xff]
        %v864 = vld [vmem:[#allocation2 + $0x109] sm:$0xff]
        %v865 = vld [vmem:[#allocation2 + $0x111] sm:$0xff]
        %v866 = vld [vmem:[#allocation2 + $0x121] sm:$0xff]
        %v867 = vld [vmem:[#allocation2 + $0x129] sm:$0xff]
        %v868 = vld [vmem:[#allocation2 + $0x139] sm:$0xff]
        %v869 = vld [vmem:[#allocation2 + $0x141] sm:$0xff]
        %v870 = vld [vmem:[#allocation2 + $0x151] sm:$0xff]
        %v871 = vld [vmem:[#allocation2 + $0x159] sm:$0xff]
        %v872 = vld [vmem:[#allocation2 + $0x169] sm:$0xff]
        %v873 = vld [vmem:[#allocation2 + $0x171] sm:$0xff]
        %v874 = vld [vmem:[#allocation8 + $0x1] sm:$0x1]
        %v875 = vlaneseq
        %v876 = vshrl.u32 %v875, 7
        %v877 = vsub.s32 0, %v876
        %v878 = vrot.slane %v874, %v877
        %v879 = vmul.f32 %v842, %v878
        %v880 = vmul.f32 %v843, %v878
        %v881 = vmul.f32 %v844, %v878
        %v882 = vmul.f32 %v845, %v878
        %v883 = vmul.f32 %v846, %v878
        %v884 = vmul.f32 %v847, %v878
        %v885 = vmul.f32 %v848, %v878
        %v886 = vmul.f32 %v849, %v878
        %v887 = vmul.f32 %v850, %v878
        %v888 = vmul.f32 %v851, %v878
        %v889 = vmul.f32 %v852, %v878
        %v890 = vmul.f32 %v853, %v878
        %v891 = vmul.f32 %v854, %v878
        %v892 = vmul.f32 %v855, %v878
        %v893 = vmul.f32 %v856, %v878
        %v894 = vmul.f32 %v857, %v878
        %v895 = vmul.f32 %v858, %v878
        %v896 = vmul.f32 %v859, %v878
        %v897 = vmul.f32 %v860, %v878
        %v898 = vmul.f32 %v861, %v878
        %v899 = vmul.f32 %v862, %v878
        %v900 = vmul.f32 %v863, %v878
        %v901 = vmul.f32 %v864, %v878
        %v902 = vmul.f32 %v865, %v878
        %v903 = vmul.f32 %v866, %v878
        %v904 = vmul.f32 %v867, %v878
        %v905 = vmul.f32 %v868, %v878
        %v906 = vmul.f32 %v869, %v878
        %v907 = vmul.f32 %v870, %v878
        %v908 = vmul.f32 %v871, %v878
        %v909 = vmul.f32 %v872, %v878
        %v910 = vmul.f32 %v873, %v878
        %v911 = vadd.f32 %v810, %v879
        %v912 = vadd.f32 %v811, %v880
        %v913 = vadd.f32 %v812, %v881
        %v914 = vadd.f32 %v813, %v882
        %v915 = vadd.f32 %v814, %v883
        %v916 = vadd.f32 %v815, %v884
        %v917 = vadd.f32 %v816, %v885
        %v918 = vadd.f32 %v817, %v886
        %v919 = vadd.f32 %v818, %v887
        %v920 = vadd.f32 %v819, %v888
        %v921 = vadd.f32 %v820, %v889
        %v922 = vadd.f32 %v821, %v890
        %v923 = vadd.f32 %v822, %v891
        %v924 = vadd.f32 %v823, %v892
        %v925 = vadd.f32 %v824, %v893
        %v926 = vadd.f32 %v825, %v894
        %v927 = vadd.f32 %v826, %v895
        %v928 = vadd.f32 %v827, %v896
        %v929 = vadd.f32 %v828, %v897
        %v930 = vadd.f32 %v829, %v898
        %v931 = vadd.f32 %v830, %v899
        %v932 = vadd.f32 %v831, %v900
        %v933 = vadd.f32 %v832, %v901
        %v934 = vadd.f32 %v833, %v902
        %v935 = vadd.f32 %v834, %v903
        %v936 = vadd.f32 %v835, %v904
        %v937 = vadd.f32 %v836, %v905
        %v938 = vadd.f32 %v837, %v906
        %v939 = vadd.f32 %v838, %v907
        %v940 = vadd.f32 %v839, %v908
        %v941 = vadd.f32 %v840, %v909
        %v942 = vadd.f32 %v841, %v910
        %v943 = vld [vmem:[#allocation2 + $0x2] sm:$0xff]
        %v944 = vld [vmem:[#allocation2 + $0xa] sm:$0xff]
        %v945 = vld [vmem:[#allocation2 + $0x1a] sm:$0xff]
        %v946 = vld [vmem:[#allocation2 + $0x22] sm:$0xff]
        %v947 = vld [vmem:[#allocation2 + $0x32] sm:$0xff]
        %v948 = vld [vmem:[#allocation2 + $0x3a] sm:$0xff]
        %v949 = vld [vmem:[#allocation2 + $0x4a] sm:$0xff]
        %v950 = vld [vmem:[#allocation2 + $0x52] sm:$0xff]
        %v951 = vld [vmem:[#allocation2 + $0x62] sm:$0xff]
        %v952 = vld [vmem:[#allocation2 + $0x6a] sm:$0xff]
        %v953 = vld [vmem:[#allocation2 + $0x7a] sm:$0xff]
        %v954 = vld [vmem:[#allocation2 + $0x82] sm:$0xff]
        %v955 = vld [vmem:[#allocation2 + $0x92] sm:$0xff]
        %v956 = vld [vmem:[#allocation2 + $0x9a] sm:$0xff]
        %v957 = vld [vmem:[#allocation2 + $0xaa] sm:$0xff]
        %v958 = vld [vmem:[#allocation2 + $0xb2] sm:$0xff]
        %v959 = vld [vmem:[#allocation2 + $0xc2] sm:$0xff]
        %v960 = vld [vmem:[#allocation2 + $0xca] sm:$0xff]
        %v961 = vld [vmem:[#allocation2 + $0xda] sm:$0xff]
        %v962 = vld [vmem:[#allocation2 + $0xe2] sm:$0xff]
        %v963 = vld [vmem:[#allocation2 + $0xf2] sm:$0xff]
        %v964 = vld [vmem:[#allocation2 + $0xfa] sm:$0xff]
        %v965 = vld [vmem:[#allocation2 + $0x10a] sm:$0xff]
        %v966 = vld [vmem:[#allocation2 + $0x112] sm:$0xff]
        %v967 = vld [vmem:[#allocation2 + $0x122] sm:$0xff]
        %v968 = vld [vmem:[#allocation2 + $0x12a] sm:$0xff]
        %v969 = vld [vmem:[#allocation2 + $0x13a] sm:$0xff]
        %v970 = vld [vmem:[#allocation2 + $0x142] sm:$0xff]
        %v971 = vld [vmem:[#allocation2 + $0x152] sm:$0xff]
        %v972 = vld [vmem:[#allocation2 + $0x15a] sm:$0xff]
        %v973 = vld [vmem:[#allocation2 + $0x16a] sm:$0xff]
        %v974 = vld [vmem:[#allocation2 + $0x172] sm:$0xff]
        %v975 = vld [vmem:[#allocation8 + $0x2] sm:$0x1]
        %v976 = vlaneseq
        %v977 = vshrl.u32 %v976, 7
        %v978 = vsub.s32 0, %v977
        %v979 = vrot.slane %v975, %v978
        %v980 = vmul.f32 %v943, %v979
        %v981 = vmul.f32 %v944, %v979
        %v982 = vmul.f32 %v945, %v979
        %v983 = vmul.f32 %v946, %v979
        %v984 = vmul.f32 %v947, %v979
        %v985 = vmul.f32 %v948, %v979
        %v986 = vmul.f32 %v949, %v979
        %v987 = vmul.f32 %v950, %v979
        %v988 = vmul.f32 %v951, %v979
        %v989 = vmul.f32 %v952, %v979
        %v990 = vmul.f32 %v953, %v979
        %v991 = vmul.f32 %v954, %v979
        %v992 = vmul.f32 %v955, %v979
        %v993 = vmul.f32 %v956, %v979
        %v994 = vmul.f32 %v957, %v979
        %v995 = vmul.f32 %v958, %v979
        %v996 = vmul.f32 %v959, %v979
        %v997 = vmul.f32 %v960, %v979
        %v998 = vmul.f32 %v961, %v979
        %v999 = vmul.f32 %v962, %v979
        %v1000 = vmul.f32 %v963, %v979
        %v1001 = vmul.f32 %v964, %v979
        %v1002 = vmul.f32 %v965, %v979
        %v1003 = vmul.f32 %v966, %v979
        %v1004 = vmul.f32 %v967, %v979
        %v1005 = vmul.f32 %v968, %v979
        %v1006 = vmul.f32 %v969, %v979
        %v1007 = vmul.f32 %v970, %v979
        %v1008 = vmul.f32 %v971, %v979
        %v1009 = vmul.f32 %v972, %v979
        %v1010 = vmul.f32 %v973, %v979
        %v1011 = vmul.f32 %v974, %v979
        %v1012 = vadd.f32 %v911, %v980
        %v1013 = vadd.f32 %v912, %v981
        %v1014 = vadd.f32 %v913, %v982
        %v1015 = vadd.f32 %v914, %v983
        %v1016 = vadd.f32 %v915, %v984
        %v1017 = vadd.f32 %v916, %v985
        %v1018 = vadd.f32 %v917, %v986
        %v1019 = vadd.f32 %v918, %v987
        %v1020 = vadd.f32 %v919, %v988
        %v1021 = vadd.f32 %v920, %v989
        %v1022 = vadd.f32 %v921, %v990
        %v1023 = vadd.f32 %v922, %v991
        %v1024 = vadd.f32 %v923, %v992
        %v1025 = vadd.f32 %v924, %v993
        %v1026 = vadd.f32 %v925, %v994
        %v1027 = vadd.f32 %v926, %v995
        %v1028 = vadd.f32 %v927, %v996
        %v1029 = vadd.f32 %v928, %v997
        %v1030 = vadd.f32 %v929, %v998
        %v1031 = vadd.f32 %v930, %v999
        %v1032 = vadd.f32 %v931, %v1000
        %v1033 = vadd.f32 %v932, %v1001
        %v1034 = vadd.f32 %v933, %v1002
        %v1035 = vadd.f32 %v934, %v1003
        %v1036 = vadd.f32 %v935, %v1004
        %v1037 = vadd.f32 %v936, %v1005
        %v1038 = vadd.f32 %v937, %v1006
        %v1039 = vadd.f32 %v938, %v1007
        %v1040 = vadd.f32 %v939, %v1008
        %v1041 = vadd.f32 %v940, %v1009
        %v1042 = vadd.f32 %v941, %v1010
        %v1043 = vadd.f32 %v942, %v1011
        %v1044 = vld [vmem:[%s708] sm:$0xff]
        %v1045 = vld [vmem:[%s708 + $0x8] sm:$0xff]
        %v1046 = vld [vmem:[%s708 + $0x18] sm:$0xff]
        %v1047 = vld [vmem:[%s708 + $0x20] sm:$0xff]
        %v1048 = vld [vmem:[%s708 + $0x30] sm:$0xff]
        %v1049 = vld [vmem:[%s708 + $0x38] sm:$0xff]
        %v1050 = vld [vmem:[%s708 + $0x48] sm:$0xff]
        %v1051 = vld [vmem:[%s708 + $0x50] sm:$0xff]
        %v1052 = vld [vmem:[%s708 + $0x60] sm:$0xff]
        %v1053 = vld [vmem:[%s708 + $0x68] sm:$0xff]
        %v1054 = vld [vmem:[%s708 + $0x78] sm:$0xff]
        %v1055 = vld [vmem:[%s708 + $0x80] sm:$0xff]
        %v1056 = vld [vmem:[%s708 + $0x90] sm:$0xff]
        %v1057 = vld [vmem:[%s708 + $0x98] sm:$0xff]
        %v1058 = vld [vmem:[%s708 + $0xa8] sm:$0xff]
        %v1059 = vld [vmem:[%s708 + $0xb0] sm:$0xff]
        %v1060 = vld [vmem:[%s708 + $0xc0] sm:$0xff]
        %v1061 = vld [vmem:[%s708 + $0xc8] sm:$0xff]
        %v1062 = vld [vmem:[%s708 + $0xd8] sm:$0xff]
        %v1063 = vld [vmem:[%s708 + $0xe0] sm:$0xff]
        %v1064 = vld [vmem:[%s708 + $0xf0] sm:$0xff]
        %v1065 = vld [vmem:[%s708 + $0xf8] sm:$0xff]
        %v1066 = vld [vmem:[%s708 + $0x108] sm:$0xff]
        %v1067 = vld [vmem:[%s708 + $0x110] sm:$0xff]
        %v1068 = vld [vmem:[%s708 + $0x120] sm:$0xff]
        %v1069 = vld [vmem:[%s708 + $0x128] sm:$0xff]
        %v1070 = vld [vmem:[%s708 + $0x138] sm:$0xff]
        %v1071 = vld [vmem:[%s708 + $0x140] sm:$0xff]
        %v1072 = vld [vmem:[%s708 + $0x150] sm:$0xff]
        %v1073 = vld [vmem:[%s708 + $0x158] sm:$0xff]
        %v1074 = vld [vmem:[%s708 + $0x168] sm:$0xff]
        %v1075 = vld [vmem:[%s708 + $0x170] sm:$0xff]
        %v1076 = vld [vmem:[#allocation8 + $0x3] sm:$0x1]
        %v1077 = vlaneseq
        %v1078 = vshrl.u32 %v1077, 7
        %v1079 = vsub.s32 0, %v1078
        %v1080 = vrot.slane %v1076, %v1079
        %v1081 = vmul.f32 %v1044, %v1080
        %v1082 = vmul.f32 %v1045, %v1080
        %v1083 = vmul.f32 %v1046, %v1080
        %v1084 = vmul.f32 %v1047, %v1080
        %v1085 = vmul.f32 %v1048, %v1080
        %v1086 = vmul.f32 %v1049, %v1080
        %v1087 = vmul.f32 %v1050, %v1080
        %v1088 = vmul.f32 %v1051, %v1080
        %v1089 = vmul.f32 %v1052, %v1080
        %v1090 = vmul.f32 %v1053, %v1080
        %v1091 = vmul.f32 %v1054, %v1080
        %v1092 = vmul.f32 %v1055, %v1080
        %v1093 = vmul.f32 %v1056, %v1080
        %v1094 = vmul.f32 %v1057, %v1080
        %v1095 = vmul.f32 %v1058, %v1080
        %v1096 = vmul.f32 %v1059, %v1080
        %v1097 = vmul.f32 %v1060, %v1080
        %v1098 = vmul.f32 %v1061, %v1080
        %v1099 = vmul.f32 %v1062, %v1080
        %v1100 = vmul.f32 %v1063, %v1080
        %v1101 = vmul.f32 %v1064, %v1080
        %v1102 = vmul.f32 %v1065, %v1080
        %v1103 = vmul.f32 %v1066, %v1080
        %v1104 = vmul.f32 %v1067, %v1080
        %v1105 = vmul.f32 %v1068, %v1080
        %v1106 = vmul.f32 %v1069, %v1080
        %v1107 = vmul.f32 %v1070, %v1080
        %v1108 = vmul.f32 %v1071, %v1080
        %v1109 = vmul.f32 %v1072, %v1080
        %v1110 = vmul.f32 %v1073, %v1080
        %v1111 = vmul.f32 %v1074, %v1080
        %v1112 = vmul.f32 %v1075, %v1080
        %v1113 = vadd.f32 %v1012, %v1081
        %v1114 = vadd.f32 %v1013, %v1082
        %v1115 = vadd.f32 %v1014, %v1083
        %v1116 = vadd.f32 %v1015, %v1084
        %v1117 = vadd.f32 %v1016, %v1085
        %v1118 = vadd.f32 %v1017, %v1086
        %v1119 = vadd.f32 %v1018, %v1087
        %v1120 = vadd.f32 %v1019, %v1088
        %v1121 = vadd.f32 %v1020, %v1089
        %v1122 = vadd.f32 %v1021, %v1090
        %v1123 = vadd.f32 %v1022, %v1091
        %v1124 = vadd.f32 %v1023, %v1092
        %v1125 = vadd.f32 %v1024, %v1093
        %v1126 = vadd.f32 %v1025, %v1094
        %v1127 = vadd.f32 %v1026, %v1095
        %v1128 = vadd.f32 %v1027, %v1096
        %v1129 = vadd.f32 %v1028, %v1097
        %v1130 = vadd.f32 %v1029, %v1098
        %v1131 = vadd.f32 %v1030, %v1099
        %v1132 = vadd.f32 %v1031, %v1100
        %v1133 = vadd.f32 %v1032, %v1101
        %v1134 = vadd.f32 %v1033, %v1102
        %v1135 = vadd.f32 %v1034, %v1103
        %v1136 = vadd.f32 %v1035, %v1104
        %v1137 = vadd.f32 %v1036, %v1105
        %v1138 = vadd.f32 %v1037, %v1106
        %v1139 = vadd.f32 %v1038, %v1107
        %v1140 = vadd.f32 %v1039, %v1108
        %v1141 = vadd.f32 %v1040, %v1109
        %v1142 = vadd.f32 %v1041, %v1110
        %v1143 = vadd.f32 %v1042, %v1111
        %v1144 = vadd.f32 %v1043, %v1112
        %v1145 = vld [vmem:[%s708 + $0x1] sm:$0xff]
        %v1146 = vld [vmem:[%s708 + $0x9] sm:$0xff]
        %v1147 = vld [vmem:[%s708 + $0x19] sm:$0xff]
        %v1148 = vld [vmem:[%s708 + $0x21] sm:$0xff]
        %v1149 = vld [vmem:[%s708 + $0x31] sm:$0xff]
        %v1150 = vld [vmem:[%s708 + $0x39] sm:$0xff]
        %v1151 = vld [vmem:[%s708 + $0x49] sm:$0xff]
        %v1152 = vld [vmem:[%s708 + $0x51] sm:$0xff]
        %v1153 = vld [vmem:[%s708 + $0x61] sm:$0xff]
        %v1154 = vld [vmem:[%s708 + $0x69] sm:$0xff]
        %v1155 = vld [vmem:[%s708 + $0x79] sm:$0xff]
        %v1156 = vld [vmem:[%s708 + $0x81] sm:$0xff]
        %v1157 = vld [vmem:[%s708 + $0x91] sm:$0xff]
        %v1158 = vld [vmem:[%s708 + $0x99] sm:$0xff]
        %v1159 = vld [vmem:[%s708 + $0xa9] sm:$0xff]
        %v1160 = vld [vmem:[%s708 + $0xb1] sm:$0xff]
        %v1161 = vld [vmem:[%s708 + $0xc1] sm:$0xff]
        %v1162 = vld [vmem:[%s708 + $0xc9] sm:$0xff]
        %v1163 = vld [vmem:[%s708 + $0xd9] sm:$0xff]
        %v1164 = vld [vmem:[%s708 + $0xe1] sm:$0xff]
        %v1165 = vld [vmem:[%s708 + $0xf1] sm:$0xff]
        %v1166 = vld [vmem:[%s708 + $0xf9] sm:$0xff]
        %v1167 = vld [vmem:[%s708 + $0x109] sm:$0xff]
        %v1168 = vld [vmem:[%s708 + $0x111] sm:$0xff]
        %v1169 = vld [vmem:[%s708 + $0x121] sm:$0xff]
        %v1170 = vld [vmem:[%s708 + $0x129] sm:$0xff]
        %v1171 = vld [vmem:[%s708 + $0x139] sm:$0xff]
        %v1172 = vld [vmem:[%s708 + $0x141] sm:$0xff]
        %v1173 = vld [vmem:[%s708 + $0x151] sm:$0xff]
        %v1174 = vld [vmem:[%s708 + $0x159] sm:$0xff]
        %v1175 = vld [vmem:[%s708 + $0x169] sm:$0xff]
        %v1176 = vld [vmem:[%s708 + $0x171] sm:$0xff]
        %v1177 = vld [vmem:[#allocation8 + $0x4] sm:$0x1]
        %v1178 = vlaneseq
        %v1179 = vshrl.u32 %v1178, 7
        %v1180 = vsub.s32 0, %v1179
        %v1181 = vrot.slane %v1177, %v1180
        %v1182 = vmul.f32 %v1145, %v1181
        %v1183 = vmul.f32 %v1146, %v1181
        %v1184 = vmul.f32 %v1147, %v1181
        %v1185 = vmul.f32 %v1148, %v1181
        %v1186 = vmul.f32 %v1149, %v1181
        %v1187 = vmul.f32 %v1150, %v1181
        %v1188 = vmul.f32 %v1151, %v1181
        %v1189 = vmul.f32 %v1152, %v1181
        %v1190 = vmul.f32 %v1153, %v1181
        %v1191 = vmul.f32 %v1154, %v1181
        %v1192 = vmul.f32 %v1155, %v1181
        %v1193 = vmul.f32 %v1156, %v1181
        %v1194 = vmul.f32 %v1157, %v1181
        %v1195 = vmul.f32 %v1158, %v1181
        %v1196 = vmul.f32 %v1159, %v1181
        %v1197 = vmul.f32 %v1160, %v1181
        %v1198 = vmul.f32 %v1161, %v1181
        %v1199 = vmul.f32 %v1162, %v1181
        %v1200 = vmul.f32 %v1163, %v1181
        %v1201 = vmul.f32 %v1164, %v1181
        %v1202 = vmul.f32 %v1165, %v1181
        %v1203 = vmul.f32 %v1166, %v1181
        %v1204 = vmul.f32 %v1167, %v1181
        %v1205 = vmul.f32 %v1168, %v1181
        %v1206 = vmul.f32 %v1169, %v1181
        %v1207 = vmul.f32 %v1170, %v1181
        %v1208 = vmul.f32 %v1171, %v1181
        %v1209 = vmul.f32 %v1172, %v1181
        %v1210 = vmul.f32 %v1173, %v1181
        %v1211 = vmul.f32 %v1174, %v1181
        %v1212 = vmul.f32 %v1175, %v1181
        %v1213 = vmul.f32 %v1176, %v1181
        %v1214 = vadd.f32 %v1113, %v1182
        %v1215 = vadd.f32 %v1114, %v1183
        %v1216 = vadd.f32 %v1115, %v1184
        %v1217 = vadd.f32 %v1116, %v1185
        %v1218 = vadd.f32 %v1117, %v1186
        %v1219 = vadd.f32 %v1118, %v1187
        %v1220 = vadd.f32 %v1119, %v1188
        %v1221 = vadd.f32 %v1120, %v1189
        %v1222 = vadd.f32 %v1121, %v1190
        %v1223 = vadd.f32 %v1122, %v1191
        %v1224 = vadd.f32 %v1123, %v1192
        %v1225 = vadd.f32 %v1124, %v1193
        %v1226 = vadd.f32 %v1125, %v1194
        %v1227 = vadd.f32 %v1126, %v1195
        %v1228 = vadd.f32 %v1127, %v1196
        %v1229 = vadd.f32 %v1128, %v1197
        %v1230 = vadd.f32 %v1129, %v1198
        %v1231 = vadd.f32 %v1130, %v1199
        %v1232 = vadd.f32 %v1131, %v1200
        %v1233 = vadd.f32 %v1132, %v1201
        %v1234 = vadd.f32 %v1133, %v1202
        %v1235 = vadd.f32 %v1134, %v1203
        %v1236 = vadd.f32 %v1135, %v1204
        %v1237 = vadd.f32 %v1136, %v1205
        %v1238 = vadd.f32 %v1137, %v1206
        %v1239 = vadd.f32 %v1138, %v1207
        %v1240 = vadd.f32 %v1139, %v1208
        %v1241 = vadd.f32 %v1140, %v1209
        %v1242 = vadd.f32 %v1141, %v1210
        %v1243 = vadd.f32 %v1142, %v1211
        %v1244 = vadd.f32 %v1143, %v1212
        %v1245 = vadd.f32 %v1144, %v1213
        %v1246 = vld [vmem:[%s708 + $0x2] sm:$0xff]
        %v1247 = vld [vmem:[%s708 + $0xa] sm:$0xff]
        %v1248 = vld [vmem:[%s708 + $0x1a] sm:$0xff]
        %v1249 = vld [vmem:[%s708 + $0x22] sm:$0xff]
        %v1250 = vld [vmem:[%s708 + $0x32] sm:$0xff]
        %v1251 = vld [vmem:[%s708 + $0x3a] sm:$0xff]
        %v1252 = vld [vmem:[%s708 + $0x4a] sm:$0xff]
        %v1253 = vld [vmem:[%s708 + $0x52] sm:$0xff]
        %v1254 = vld [vmem:[%s708 + $0x62] sm:$0xff]
        %v1255 = vld [vmem:[%s708 + $0x6a] sm:$0xff]
        %v1256 = vld [vmem:[%s708 + $0x7a] sm:$0xff]
        %v1257 = vld [vmem:[%s708 + $0x82] sm:$0xff]
        %v1258 = vld [vmem:[%s708 + $0x92] sm:$0xff]
        %v1259 = vld [vmem:[%s708 + $0x9a] sm:$0xff]
        %v1260 = vld [vmem:[%s708 + $0xaa] sm:$0xff]
        %v1261 = vld [vmem:[%s708 + $0xb2] sm:$0xff]
        %v1262 = vld [vmem:[%s708 + $0xc2] sm:$0xff]
        %v1263 = vld [vmem:[%s708 + $0xca] sm:$0xff]
        %v1264 = vld [vmem:[%s708 + $0xda] sm:$0xff]
        %v1265 = vld [vmem:[%s708 + $0xe2] sm:$0xff]
        %v1266 = vld [vmem:[%s708 + $0xf2] sm:$0xff]
        %v1267 = vld [vmem:[%s708 + $0xfa] sm:$0xff]
        %v1268 = vld [vmem:[%s708 + $0x10a] sm:$0xff]
        %v1269 = vld [vmem:[%s708 + $0x112] sm:$0xff]
        %v1270 = vld [vmem:[%s708 + $0x122] sm:$0xff]
        %v1271 = vld [vmem:[%s708 + $0x12a] sm:$0xff]
        %v1272 = vld [vmem:[%s708 + $0x13a] sm:$0xff]
        %v1273 = vld [vmem:[%s708 + $0x142] sm:$0xff]
        %v1274 = vld [vmem:[%s708 + $0x152] sm:$0xff]
        %v1275 = vld [vmem:[%s708 + $0x15a] sm:$0xff]
        %v1276 = vld [vmem:[%s708 + $0x16a] sm:$0xff]
        %v1277 = vld [vmem:[%s708 + $0x172] sm:$0xff]
        %v1278 = vld [vmem:[#allocation8 + $0x5] sm:$0x1]
        %v1279 = vlaneseq
        %v1280 = vshrl.u32 %v1279, 7
        %v1281 = vsub.s32 0, %v1280
        %v1282 = vrot.slane %v1278, %v1281
        %v1283 = vmul.f32 %v1246, %v1282
        %v1284 = vmul.f32 %v1247, %v1282
        %v1285 = vmul.f32 %v1248, %v1282
        %v1286 = vmul.f32 %v1249, %v1282
        %v1287 = vmul.f32 %v1250, %v1282
        %v1288 = vmul.f32 %v1251, %v1282
        %v1289 = vmul.f32 %v1252, %v1282
        %v1290 = vmul.f32 %v1253, %v1282
        %v1291 = vmul.f32 %v1254, %v1282
        %v1292 = vmul.f32 %v1255, %v1282
        %v1293 = vmul.f32 %v1256, %v1282
        %v1294 = vmul.f32 %v1257, %v1282
        %v1295 = vmul.f32 %v1258, %v1282
        %v1296 = vmul.f32 %v1259, %v1282
        %v1297 = vmul.f32 %v1260, %v1282
        %v1298 = vmul.f32 %v1261, %v1282
        %v1299 = vmul.f32 %v1262, %v1282
        %v1300 = vmul.f32 %v1263, %v1282
        %v1301 = vmul.f32 %v1264, %v1282
        %v1302 = vmul.f32 %v1265, %v1282
        %v1303 = vmul.f32 %v1266, %v1282
        %v1304 = vmul.f32 %v1267, %v1282
        %v1305 = vmul.f32 %v1268, %v1282
        %v1306 = vmul.f32 %v1269, %v1282
        %v1307 = vmul.f32 %v1270, %v1282
        %v1308 = vmul.f32 %v1271, %v1282
        %v1309 = vmul.f32 %v1272, %v1282
        %v1310 = vmul.f32 %v1273, %v1282
        %v1311 = vmul.f32 %v1274, %v1282
        %v1312 = vmul.f32 %v1275, %v1282
        %v1313 = vmul.f32 %v1276, %v1282
        %v1314 = vmul.f32 %v1277, %v1282
        %v1315 = vadd.f32 %v1214, %v1283
        %v1316 = vadd.f32 %v1215, %v1284
        %v1317 = vadd.f32 %v1216, %v1285
        %v1318 = vadd.f32 %v1217, %v1286
        %v1319 = vadd.f32 %v1218, %v1287
        %v1320 = vadd.f32 %v1219, %v1288
        %v1321 = vadd.f32 %v1220, %v1289
        %v1322 = vadd.f32 %v1221, %v1290
        %v1323 = vadd.f32 %v1222, %v1291
        %v1324 = vadd.f32 %v1223, %v1292
        %v1325 = vadd.f32 %v1224, %v1293
        %v1326 = vadd.f32 %v1225, %v1294
        %v1327 = vadd.f32 %v1226, %v1295
        %v1328 = vadd.f32 %v1227, %v1296
        %v1329 = vadd.f32 %v1228, %v1297
        %v1330 = vadd.f32 %v1229, %v1298
        %v1331 = vadd.f32 %v1230, %v1299
        %v1332 = vadd.f32 %v1231, %v1300
        %v1333 = vadd.f32 %v1232, %v1301
        %v1334 = vadd.f32 %v1233, %v1302
        %v1335 = vadd.f32 %v1234, %v1303
        %v1336 = vadd.f32 %v1235, %v1304
        %v1337 = vadd.f32 %v1236, %v1305
        %v1338 = vadd.f32 %v1237, %v1306
        %v1339 = vadd.f32 %v1238, %v1307
        %v1340 = vadd.f32 %v1239, %v1308
        %v1341 = vadd.f32 %v1240, %v1309
        %v1342 = vadd.f32 %v1241, %v1310
        %v1343 = vadd.f32 %v1242, %v1311
        %v1344 = vadd.f32 %v1243, %v1312
        %v1345 = vadd.f32 %v1244, %v1313
        %v1346 = vadd.f32 %v1245, %v1314
        %s1347 = scalar_lea.vmem [#allocation2], 48
        %v1348 = vld [vmem:[%s1347] sm:$0xff]
        %v1349 = vld [vmem:[%s1347 + $0x8] sm:$0xff]
        %v1350 = vld [vmem:[%s1347 + $0x18] sm:$0xff]
        %v1351 = vld [vmem:[%s1347 + $0x20] sm:$0xff]
        %v1352 = vld [vmem:[%s1347 + $0x30] sm:$0xff]
        %v1353 = vld [vmem:[%s1347 + $0x38] sm:$0xff]
        %v1354 = vld [vmem:[%s1347 + $0x48] sm:$0xff]
        %v1355 = vld [vmem:[%s1347 + $0x50] sm:$0xff]
        %v1356 = vld [vmem:[%s1347 + $0x60] sm:$0xff]
        %v1357 = vld [vmem:[%s1347 + $0x68] sm:$0xff]
        %v1358 = vld [vmem:[%s1347 + $0x78] sm:$0xff]
        %v1359 = vld [vmem:[%s1347 + $0x80] sm:$0xff]
        %v1360 = vld [vmem:[%s1347 + $0x90] sm:$0xff]
        %v1361 = vld [vmem:[%s1347 + $0x98] sm:$0xff]
        %v1362 = vld [vmem:[%s1347 + $0xa8] sm:$0xff]
        %v1363 = vld [vmem:[%s1347 + $0xb0] sm:$0xff]
        %v1364 = vld [vmem:[%s1347 + $0xc0] sm:$0xff]
        %v1365 = vld [vmem:[%s1347 + $0xc8] sm:$0xff]
        %v1366 = vld [vmem:[%s1347 + $0xd8] sm:$0xff]
        %v1367 = vld [vmem:[%s1347 + $0xe0] sm:$0xff]
        %v1368 = vld [vmem:[%s1347 + $0xf0] sm:$0xff]
        %v1369 = vld [vmem:[%s1347 + $0xf8] sm:$0xff]
        %v1370 = vld [vmem:[%s1347 + $0x108] sm:$0xff]
        %v1371 = vld [vmem:[%s1347 + $0x110] sm:$0xff]
        %v1372 = vld [vmem:[%s1347 + $0x120] sm:$0xff]
        %v1373 = vld [vmem:[%s1347 + $0x128] sm:$0xff]
        %v1374 = vld [vmem:[%s1347 + $0x138] sm:$0xff]
        %v1375 = vld [vmem:[%s1347 + $0x140] sm:$0xff]
        %v1376 = vld [vmem:[%s1347 + $0x150] sm:$0xff]
        %v1377 = vld [vmem:[%s1347 + $0x158] sm:$0xff]
        %v1378 = vld [vmem:[%s1347 + $0x168] sm:$0xff]
        %v1379 = vld [vmem:[%s1347 + $0x170] sm:$0xff]
        %v1380 = vld [vmem:[#allocation8 + $0x6] sm:$0x1]
        %v1381 = vlaneseq
        %v1382 = vshrl.u32 %v1381, 7
        %v1383 = vsub.s32 0, %v1382
        %v1384 = vrot.slane %v1380, %v1383
        %v1385 = vmul.f32 %v1348, %v1384
        %v1386 = vmul.f32 %v1349, %v1384
        %v1387 = vmul.f32 %v1350, %v1384
        %v1388 = vmul.f32 %v1351, %v1384
        %v1389 = vmul.f32 %v1352, %v1384
        %v1390 = vmul.f32 %v1353, %v1384
        %v1391 = vmul.f32 %v1354, %v1384
        %v1392 = vmul.f32 %v1355, %v1384
        %v1393 = vmul.f32 %v1356, %v1384
        %v1394 = vmul.f32 %v1357, %v1384
        %v1395 = vmul.f32 %v1358, %v1384
        %v1396 = vmul.f32 %v1359, %v1384
        %v1397 = vmul.f32 %v1360, %v1384
        %v1398 = vmul.f32 %v1361, %v1384
        %v1399 = vmul.f32 %v1362, %v1384
        %v1400 = vmul.f32 %v1363, %v1384
        %v1401 = vmul.f32 %v1364, %v1384
        %v1402 = vmul.f32 %v1365, %v1384
        %v1403 = vmul.f32 %v1366, %v1384
        %v1404 = vmul.f32 %v1367, %v1384
        %v1405 = vmul.f32 %v1368, %v1384
        %v1406 = vmul.f32 %v1369, %v1384
        %v1407 = vmul.f32 %v1370, %v1384
        %v1408 = vmul.f32 %v1371, %v1384
        %v1409 = vmul.f32 %v1372, %v1384
        %v1410 = vmul.f32 %v1373, %v1384
        %v1411 = vmul.f32 %v1374, %v1384
        %v1412 = vmul.f32 %v1375, %v1384
        %v1413 = vmul.f32 %v1376, %v1384
        %v1414 = vmul.f32 %v1377, %v1384
        %v1415 = vmul.f32 %v1378, %v1384
        %v1416 = vmul.f32 %v1379, %v1384
        %v1417 = vadd.f32 %v1315, %v1385
        %v1418 = vadd.f32 %v1316, %v1386
        %v1419 = vadd.f32 %v1317, %v1387
        %v1420 = vadd.f32 %v1318, %v1388
        %v1421 = vadd.f32 %v1319, %v1389
        %v1422 = vadd.f32 %v1320, %v1390
        %v1423 = vadd.f32 %v1321, %v1391
        %v1424 = vadd.f32 %v1322, %v1392
        %v1425 = vadd.f32 %v1323, %v1393
        %v1426 = vadd.f32 %v1324, %v1394
        %v1427 = vadd.f32 %v1325, %v1395
        %v1428 = vadd.f32 %v1326, %v1396
        %v1429 = vadd.f32 %v1327, %v1397
        %v1430 = vadd.f32 %v1328, %v1398
        %v1431 = vadd.f32 %v1329, %v1399
        %v1432 = vadd.f32 %v1330, %v1400
        %v1433 = vadd.f32 %v1331, %v1401
        %v1434 = vadd.f32 %v1332, %v1402
        %v1435 = vadd.f32 %v1333, %v1403
        %v1436 = vadd.f32 %v1334, %v1404
        %v1437 = vadd.f32 %v1335, %v1405
        %v1438 = vadd.f32 %v1336, %v1406
        %v1439 = vadd.f32 %v1337, %v1407
        %v1440 = vadd.f32 %v1338, %v1408
        %v1441 = vadd.f32 %v1339, %v1409
        %v1442 = vadd.f32 %v1340, %v1410
        %v1443 = vadd.f32 %v1341, %v1411
        %v1444 = vadd.f32 %v1342, %v1412
        %v1445 = vadd.f32 %v1343, %v1413
        %v1446 = vadd.f32 %v1344, %v1414
        %v1447 = vadd.f32 %v1345, %v1415
        %v1448 = vadd.f32 %v1346, %v1416
        %v1449 = vld [vmem:[%s1347 + $0x1] sm:$0xff]
        %v1450 = vld [vmem:[%s1347 + $0x9] sm:$0xff]
        %v1451 = vld [vmem:[%s1347 + $0x19] sm:$0xff]
        %v1452 = vld [vmem:[%s1347 + $0x21] sm:$0xff]
        %v1453 = vld [vmem:[%s1347 + $0x31] sm:$0xff]
        %v1454 = vld [vmem:[%s1347 + $0x39] sm:$0xff]
        %v1455 = vld [vmem:[%s1347 + $0x49] sm:$0xff]
        %v1456 = vld [vmem:[%s1347 + $0x51] sm:$0xff]
        %v1457 = vld [vmem:[%s1347 + $0x61] sm:$0xff]
        %v1458 = vld [vmem:[%s1347 + $0x69] sm:$0xff]
        %v1459 = vld [vmem:[%s1347 + $0x79] sm:$0xff]
        %v1460 = vld [vmem:[%s1347 + $0x81] sm:$0xff]
        %v1461 = vld [vmem:[%s1347 + $0x91] sm:$0xff]
        %v1462 = vld [vmem:[%s1347 + $0x99] sm:$0xff]
        %v1463 = vld [vmem:[%s1347 + $0xa9] sm:$0xff]
        %v1464 = vld [vmem:[%s1347 + $0xb1] sm:$0xff]
        %v1465 = vld [vmem:[%s1347 + $0xc1] sm:$0xff]
        %v1466 = vld [vmem:[%s1347 + $0xc9] sm:$0xff]
        %v1467 = vld [vmem:[%s1347 + $0xd9] sm:$0xff]
        %v1468 = vld [vmem:[%s1347 + $0xe1] sm:$0xff]
        %v1469 = vld [vmem:[%s1347 + $0xf1] sm:$0xff]
        %v1470 = vld [vmem:[%s1347 + $0xf9] sm:$0xff]
        %v1471 = vld [vmem:[%s1347 + $0x109] sm:$0xff]
        %v1472 = vld [vmem:[%s1347 + $0x111] sm:$0xff]
        %v1473 = vld [vmem:[%s1347 + $0x121] sm:$0xff]
        %v1474 = vld [vmem:[%s1347 + $0x129] sm:$0xff]
        %v1475 = vld [vmem:[%s1347 + $0x139] sm:$0xff]
        %v1476 = vld [vmem:[%s1347 + $0x141] sm:$0xff]
        %v1477 = vld [vmem:[%s1347 + $0x151] sm:$0xff]
        %v1478 = vld [vmem:[%s1347 + $0x159] sm:$0xff]
        %v1479 = vld [vmem:[%s1347 + $0x169] sm:$0xff]
        %v1480 = vld [vmem:[%s1347 + $0x171] sm:$0xff]
        %v1481 = vld [vmem:[#allocation8 + $0x7] sm:$0x1]
        %v1482 = vlaneseq
        %v1483 = vshrl.u32 %v1482, 7
        %v1484 = vsub.s32 0, %v1483
        %v1485 = vrot.slane %v1481, %v1484
        %v1486 = vmul.f32 %v1449, %v1485
        %v1487 = vmul.f32 %v1450, %v1485
        %v1488 = vmul.f32 %v1451, %v1485
        %v1489 = vmul.f32 %v1452, %v1485
        %v1490 = vmul.f32 %v1453, %v1485
        %v1491 = vmul.f32 %v1454, %v1485
        %v1492 = vmul.f32 %v1455, %v1485
        %v1493 = vmul.f32 %v1456, %v1485
        %v1494 = vmul.f32 %v1457, %v1485
        %v1495 = vmul.f32 %v1458, %v1485
        %v1496 = vmul.f32 %v1459, %v1485
        %v1497 = vmul.f32 %v1460, %v1485
        %v1498 = vmul.f32 %v1461, %v1485
        %v1499 = vmul.f32 %v1462, %v1485
        %v1500 = vmul.f32 %v1463, %v1485
        %v1501 = vmul.f32 %v1464, %v1485
        %v1502 = vmul.f32 %v1465, %v1485
        %v1503 = vmul.f32 %v1466, %v1485
        %v1504 = vmul.f32 %v1467, %v1485
        %v1505 = vmul.f32 %v1468, %v1485
        %v1506 = vmul.f32 %v1469, %v1485
        %v1507 = vmul.f32 %v1470, %v1485
        %v1508 = vmul.f32 %v1471, %v1485
        %v1509 = vmul.f32 %v1472, %v1485
        %v1510 = vmul.f32 %v1473, %v1485
        %v1511 = vmul.f32 %v1474, %v1485
        %v1512 = vmul.f32 %v1475, %v1485
        %v1513 = vmul.f32 %v1476, %v1485
        %v1514 = vmul.f32 %v1477, %v1485
        %v1515 = vmul.f32 %v1478, %v1485
        %v1516 = vmul.f32 %v1479, %v1485
        %v1517 = vmul.f32 %v1480, %v1485
        %v1518 = vadd.f32 %v1417, %v1486
        %v1519 = vadd.f32 %v1418, %v1487
        %v1520 = vadd.f32 %v1419, %v1488
        %v1521 = vadd.f32 %v1420, %v1489
        %v1522 = vadd.f32 %v1421, %v1490
        %v1523 = vadd.f32 %v1422, %v1491
        %v1524 = vadd.f32 %v1423, %v1492
        %v1525 = vadd.f32 %v1424, %v1493
        %v1526 = vadd.f32 %v1425, %v1494
        %v1527 = vadd.f32 %v1426, %v1495
        %v1528 = vadd.f32 %v1427, %v1496
        %v1529 = vadd.f32 %v1428, %v1497
        %v1530 = vadd.f32 %v1429, %v1498
        %v1531 = vadd.f32 %v1430, %v1499
        %v1532 = vadd.f32 %v1431, %v1500
        %v1533 = vadd.f32 %v1432, %v1501
        %v1534 = vadd.f32 %v1433, %v1502
        %v1535 = vadd.f32 %v1434, %v1503
        %v1536 = vadd.f32 %v1435, %v1504
        %v1537 = vadd.f32 %v1436, %v1505
        %v1538 = vadd.f32 %v1437, %v1506
        %v1539 = vadd.f32 %v1438, %v1507
        %v1540 = vadd.f32 %v1439, %v1508
        %v1541 = vadd.f32 %v1440, %v1509
        %v1542 = vadd.f32 %v1441, %v1510
        %v1543 = vadd.f32 %v1442, %v1511
        %v1544 = vadd.f32 %v1443, %v1512
        %v1545 = vadd.f32 %v1444, %v1513
        %v1546 = vadd.f32 %v1445, %v1514
        %v1547 = vadd.f32 %v1446, %v1515
        %v1548 = vadd.f32 %v1447, %v1516
        %v1549 = vadd.f32 %v1448, %v1517
        %v1550 = vld [vmem:[%s1347 + $0x2] sm:$0xff]
        %v1551 = vld [vmem:[%s1347 + $0xa] sm:$0xff]
        %v1552 = vld [vmem:[%s1347 + $0x1a] sm:$0xff]
        %v1553 = vld [vmem:[%s1347 + $0x22] sm:$0xff]
        %v1554 = vld [vmem:[%s1347 + $0x32] sm:$0xff]
        %v1555 = vld [vmem:[%s1347 + $0x3a] sm:$0xff]
        %v1556 = vld [vmem:[%s1347 + $0x4a] sm:$0xff]
        %v1557 = vld [vmem:[%s1347 + $0x52] sm:$0xff]
        %v1558 = vld [vmem:[%s1347 + $0x62] sm:$0xff]
        %v1559 = vld [vmem:[%s1347 + $0x6a] sm:$0xff]
        %v1560 = vld [vmem:[%s1347 + $0x7a] sm:$0xff]
        %v1561 = vld [vmem:[%s1347 + $0x82] sm:$0xff]
        %v1562 = vld [vmem:[%s1347 + $0x92] sm:$0xff]
        %v1563 = vld [vmem:[%s1347 + $0x9a] sm:$0xff]
        %v1564 = vld [vmem:[%s1347 + $0xaa] sm:$0xff]
        %v1565 = vld [vmem:[%s1347 + $0xb2] sm:$0xff]
        %v1566 = vld [vmem:[%s1347 + $0xc2] sm:$0xff]
        %v1567 = vld [vmem:[%s1347 + $0xca] sm:$0xff]
        %v1568 = vld [vmem:[%s1347 + $0xda] sm:$0xff]
        %v1569 = vld [vmem:[%s1347 + $0xe2] sm:$0xff]
        %v1570 = vld [vmem:[%s1347 + $0xf2] sm:$0xff]
        %v1571 = vld [vmem:[%s1347 + $0xfa] sm:$0xff]
        %v1572 = vld [vmem:[%s1347 + $0x10a] sm:$0xff]
        %v1573 = vld [vmem:[%s1347 + $0x112] sm:$0xff]
        %v1574 = vld [vmem:[%s1347 + $0x122] sm:$0xff]
        %v1575 = vld [vmem:[%s1347 + $0x12a] sm:$0xff]
        %v1576 = vld [vmem:[%s1347 + $0x13a] sm:$0xff]
        %v1577 = vld [vmem:[%s1347 + $0x142] sm:$0xff]
        %v1578 = vld [vmem:[%s1347 + $0x152] sm:$0xff]
        %v1579 = vld [vmem:[%s1347 + $0x15a] sm:$0xff]
        %v1580 = vld [vmem:[%s1347 + $0x16a] sm:$0xff]
        %v1581 = vld [vmem:[%s1347 + $0x172] sm:$0xff]
        %v1582 = vld [vmem:[#allocation8 + $0x8] sm:$0x1]
        %v1583 = vlaneseq
        %v1584 = vshrl.u32 %v1583, 7
        %v1585 = vsub.s32 0, %v1584
        %v1586 = vrot.slane %v1582, %v1585
        %v1587 = vmul.f32 %v1550, %v1586
        %v1588 = vmul.f32 %v1551, %v1586
        %v1589 = vmul.f32 %v1552, %v1586
        %v1590 = vmul.f32 %v1553, %v1586
        %v1591 = vmul.f32 %v1554, %v1586
        %v1592 = vmul.f32 %v1555, %v1586
        %v1593 = vmul.f32 %v1556, %v1586
        %v1594 = vmul.f32 %v1557, %v1586
        %v1595 = vmul.f32 %v1558, %v1586
        %v1596 = vmul.f32 %v1559, %v1586
        %v1597 = vmul.f32 %v1560, %v1586
        %v1598 = vmul.f32 %v1561, %v1586
        %v1599 = vmul.f32 %v1562, %v1586
        %v1600 = vmul.f32 %v1563, %v1586
        %v1601 = vmul.f32 %v1564, %v1586
        %v1602 = vmul.f32 %v1565, %v1586
        %v1603 = vmul.f32 %v1566, %v1586
        %v1604 = vmul.f32 %v1567, %v1586
        %v1605 = vmul.f32 %v1568, %v1586
        %v1606 = vmul.f32 %v1569, %v1586
        %v1607 = vmul.f32 %v1570, %v1586
        %v1608 = vmul.f32 %v1571, %v1586
        %v1609 = vmul.f32 %v1572, %v1586
        %v1610 = vmul.f32 %v1573, %v1586
        %v1611 = vmul.f32 %v1574, %v1586
        %v1612 = vmul.f32 %v1575, %v1586
        %v1613 = vmul.f32 %v1576, %v1586
        %v1614 = vmul.f32 %v1577, %v1586
        %v1615 = vmul.f32 %v1578, %v1586
        %v1616 = vmul.f32 %v1579, %v1586
        %v1617 = vmul.f32 %v1580, %v1586
        %v1618 = vmul.f32 %v1581, %v1586
        %v1619 = vadd.f32 %v1518, %v1587
        %v1620 = vadd.f32 %v1519, %v1588
        %v1621 = vadd.f32 %v1520, %v1589
        %v1622 = vadd.f32 %v1521, %v1590
        %v1623 = vadd.f32 %v1522, %v1591
        %v1624 = vadd.f32 %v1523, %v1592
        %v1625 = vadd.f32 %v1524, %v1593
        %v1626 = vadd.f32 %v1525, %v1594
        %v1627 = vadd.f32 %v1526, %v1595
        %v1628 = vadd.f32 %v1527, %v1596
        %v1629 = vadd.f32 %v1528, %v1597
        %v1630 = vadd.f32 %v1529, %v1598
        %v1631 = vadd.f32 %v1530, %v1599
        %v1632 = vadd.f32 %v1531, %v1600
        %v1633 = vadd.f32 %v1532, %v1601
        %v1634 = vadd.f32 %v1533, %v1602
        %v1635 = vadd.f32 %v1534, %v1603
        %v1636 = vadd.f32 %v1535, %v1604
        %v1637 = vadd.f32 %v1536, %v1605
        %v1638 = vadd.f32 %v1537, %v1606
        %v1639 = vadd.f32 %v1538, %v1607
        %v1640 = vadd.f32 %v1539, %v1608
        %v1641 = vadd.f32 %v1540, %v1609
        %v1642 = vadd.f32 %v1541, %v1610
        %v1643 = vadd.f32 %v1542, %v1611
        %v1644 = vadd.f32 %v1543, %v1612
        %v1645 = vadd.f32 %v1544, %v1613
        %v1646 = vadd.f32 %v1545, %v1614
        %v1647 = vadd.f32 %v1546, %v1615
        %v1648 = vadd.f32 %v1547, %v1616
        %v1649 = vadd.f32 %v1548, %v1617
        %v1650 = vadd.f32 %v1549, %v1618
        %v1651 = vld [vmem:[%s4] sm:$0x1]
        %v1653 = vlaneseq
        %v1654 = vshrl.u32 %v1653, 7
        %v1655 = vsub.s32 0, %v1654
        %v1656 = vrot.slane %v1651, %v1655
        %v1658 = vadd.f32 %v1619, %v1656
        %v1659 = vadd.f32 %v1620, %v1656
        %v1660 = vadd.f32 %v1621, %v1656
        %v1661 = vadd.f32 %v1622, %v1656
        %v1662 = vadd.f32 %v1623, %v1656
        %v1663 = vadd.f32 %v1624, %v1656
        %v1664 = vadd.f32 %v1625, %v1656
        %v1665 = vadd.f32 %v1626, %v1656
        %v1666 = vadd.f32 %v1627, %v1656
        %v1667 = vadd.f32 %v1628, %v1656
        %v1668 = vadd.f32 %v1629, %v1656
        %v1669 = vadd.f32 %v1630, %v1656
        %v1670 = vadd.f32 %v1631, %v1656
        %v1671 = vadd.f32 %v1632, %v1656
        %v1672 = vadd.f32 %v1633, %v1656
        %v1673 = vadd.f32 %v1634, %v1656
        %v1674 = vadd.f32 %v1635, %v1656
        %v1675 = vadd.f32 %v1636, %v1656
        %v1676 = vadd.f32 %v1637, %v1656
        %v1677 = vadd.f32 %v1638, %v1656
        %v1678 = vadd.f32 %v1639, %v1656
        %v1679 = vadd.f32 %v1640, %v1656
        %v1680 = vadd.f32 %v1641, %v1656
        %v1681 = vadd.f32 %v1642, %v1656
        %v1682 = vadd.f32 %v1643, %v1656
        %v1683 = vadd.f32 %v1644, %v1656
        %v1684 = vadd.f32 %v1645, %v1656
        %v1685 = vadd.f32 %v1646, %v1656
        %v1686 = vadd.f32 %v1647, %v1656
        %v1687 = vadd.f32 %v1648, %v1656
        %v1688 = vadd.f32 %v1649, %v1656
        %v1689 = vadd.f32 %v1650, %v1656
        %v1690 = vmax.f32 %v1658, 0.0
        %v1691 = vmax.f32 %v1659, 0.0
        %v1692 = vmax.f32 %v1660, 0.0
        %v1693 = vmax.f32 %v1661, 0.0
        %v1694 = vmax.f32 %v1662, 0.0
        %v1695 = vmax.f32 %v1663, 0.0
        %v1696 = vmax.f32 %v1664, 0.0
        %v1697 = vmax.f32 %v1665, 0.0
        %v1698 = vmax.f32 %v1666, 0.0
        %v1699 = vmax.f32 %v1667, 0.0
        %v1700 = vmax.f32 %v1668, 0.0
        %v1701 = vmax.f32 %v1669, 0.0
        %v1702 = vmax.f32 %v1670, 0.0
        %v1703 = vmax.f32 %v1671, 0.0
        %v1704 = vmax.f32 %v1672, 0.0
        %v1705 = vmax.f32 %v1673, 0.0
        %v1706 = vmax.f32 %v1674, 0.0
        %v1707 = vmax.f32 %v1675, 0.0
        %v1708 = vmax.f32 %v1676, 0.0
        %v1709 = vmax.f32 %v1677, 0.0
        %v1710 = vmax.f32 %v1678, 0.0
        %v1711 = vmax.f32 %v1679, 0.0
        %v1712 = vmax.f32 %v1680, 0.0
        %v1713 = vmax.f32 %v1681, 0.0
        %v1714 = vmax.f32 %v1682, 0.0
        %v1715 = vmax.f32 %v1683, 0.0
        %v1716 = vmax.f32 %v1684, 0.0
        %v1717 = vmax.f32 %v1685, 0.0
        %v1718 = vmax.f32 %v1686, 0.0
        %v1719 = vmax.f32 %v1687, 0.0
        %v1720 = vmax.f32 %v1688, 0.0
        %v1721 = vmax.f32 %v1689, 0.0
        %v1722 = vpack.c.bf16 %v1691, %v1690
        %v1723 = vpack.c.bf16 %v1693, %v1692
        %v1724 = vpack.c.bf16 %v1695, %v1694
        %v1725 = vpack.c.bf16 %v1697, %v1696
        %v1726 = vpack.c.bf16 %v1699, %v1698
        %v1727 = vpack.c.bf16 %v1701, %v1700
        %v1728 = vpack.c.bf16 %v1703, %v1702
        %v1729 = vpack.c.bf16 %v1705, %v1704
        %v1730 = vpack.c.bf16 %v1707, %v1706
        %v1731 = vpack.c.bf16 %v1709, %v1708
        %v1732 = vpack.c.bf16 %v1711, %v1710
        %v1733 = vpack.c.bf16 %v1713, %v1712
        %v1734 = vpack.c.bf16 %v1715, %v1714
        %v1735 = vpack.c.bf16 %v1717, %v1716
        %v1736 = vpack.c.bf16 %v1719, %v1718
        %v1737 = vpack.c.bf16 %v1721, %v1720
        %v1738 = vld [vmem:[#allocation9] sm:$0xf]
        %v1739 = vld [vmem:[#allocation9 + $0x4] sm:$0xf]
        %v1740 = vld [vmem:[#allocation9 + $0x8] sm:$0xf]
        %v1741 = vld [vmem:[#allocation9 + $0xc] sm:$0xf]
        %v1742 = vld [vmem:[#allocation9 + $0x10] sm:$0xf]
        %v1743 = vld [vmem:[#allocation9 + $0x14] sm:$0xf]
        %v1744 = vld [vmem:[#allocation9 + $0x18] sm:$0xf]
        %v1745 = vld [vmem:[#allocation9 + $0x1c] sm:$0xf]
        %v1746 = vld [vmem:[#allocation9 + $0x20] sm:$0xf]
        %v1747 = vld [vmem:[#allocation9 + $0x24] sm:$0xf]
        %v1748 = vld [vmem:[#allocation9 + $0x28] sm:$0xf]
        %v1749 = vld [vmem:[#allocation9 + $0x2c] sm:$0xf]
        %v1750 = vld [vmem:[#allocation9 + $0x30] sm:$0xf]
        %v1751 = vld [vmem:[#allocation9 + $0x34] sm:$0xf]
        %v1752 = vld [vmem:[#allocation9 + $0x38] sm:$0xf]
        %v1753 = vld [vmem:[#allocation9 + $0x3c] sm:$0xf]
        %v1754 = vld [vmem:[%s6] sm:$0x1]
        %v1756 = vlaneseq
        %v1757 = vshrl.u32 %v1756, 7
        %v1758 = vsub.s32 0, %v1757
        %v1759 = vrot.slane %v1754, %v1758
        %v1777 = vunpack.c.l.b16 %v1738
        %v1778 = vunpack.c.l.b16 %v1739
        %v1779 = vunpack.c.l.b16 %v1740
        %v1780 = vunpack.c.l.b16 %v1741
        %v1781 = vunpack.c.l.b16 %v1742
        %v1782 = vunpack.c.l.b16 %v1743
        %v1783 = vunpack.c.l.b16 %v1744
        %v1784 = vunpack.c.l.b16 %v1745
        %v1785 = vunpack.c.l.b16 %v1746
        %v1786 = vunpack.c.l.b16 %v1747
        %v1787 = vunpack.c.l.b16 %v1748
        %v1788 = vunpack.c.l.b16 %v1749
        %v1789 = vunpack.c.l.b16 %v1750
        %v1790 = vunpack.c.l.b16 %v1751
        %v1791 = vunpack.c.l.b16 %v1752
        %v1792 = vunpack.c.l.b16 %v1753
        %v1793 = vpack.c.b16 %v1778, %v1777
        %v1794 = vpack.c.b16 %v1780, %v1779
        %v1795 = vpack.c.b16 %v1782, %v1781
        %v1796 = vpack.c.b16 %v1784, %v1783
        %v1797 = vpack.c.b16 %v1786, %v1785
        %v1798 = vpack.c.b16 %v1788, %v1787
        %v1799 = vpack.c.b16 %v1790, %v1789
        %v1800 = vpack.c.b16 %v1792, %v1791
        %1809 = vmatprep.subr.bf16.mxu0 0
        %1810 = vmatpush1.bf16.msra.mxu0 %v1793
        %1811 = vmatprep.subr.bf16.mxu0 0
        %1812 = vmatpush1.bf16.msra.mxu0 %v1794
        %1813 = vmatprep.subr.bf16.mxu0 0
        %1814 = vmatpush1.bf16.msra.mxu0 %v1795
        %1815 = vmatprep.subr.bf16.mxu0 0
        %1816 = vmatpush1.bf16.msra.mxu0 %v1796
        %1817 = vmatprep.subr.bf16.mxu0 0
        %1818 = vmatpush1.bf16.msra.mxu0 %v1797
        %1819 = vmatprep.subr.bf16.mxu0 0
        %1820 = vmatpush1.bf16.msra.mxu0 %v1798
        %1821 = vmatprep.subr.bf16.mxu0 0
        %1822 = vmatpush1.bf16.msra.mxu0 %v1799
        %1823 = vmatprep.subr.bf16.mxu0 0
        %1824 = vmatpush1.bf16.msra.mxu0 %v1800
        %1825 = vmatprep.subr.bf16.mxu0 0
        %1826 = vmatpush1.bf16.msra.mxu0 0
        %1827 = vmatprep.subr.bf16.mxu0 0
        %1828 = vmatpush1.bf16.msra.mxu0 0
        %1829 = vmatprep.subr.bf16.mxu0 0
        %1830 = vmatpush1.bf16.msra.mxu0 0
        %1831 = vmatprep.subr.bf16.mxu0 0
        %1832 = vmatpush1.bf16.msra.mxu0 0
        %1833 = vmatprep.subr.bf16.mxu0 0
        %1834 = vmatpush1.bf16.msra.mxu0 0
        %1835 = vmatprep.subr.bf16.mxu0 0
        %1836 = vmatpush1.bf16.msra.mxu0 0
        %1837 = vmatprep.subr.bf16.mxu0 0
        %1838 = vmatpush1.bf16.msra.mxu0 0
        %1839 = vmatprep.subr.bf16.mxu0 0
        %1840 = vmatpush1.bf16.msra.mxu0 0
        %1841 = vmatprep.mubr.bf16.mxu0 0
        %1842 = vmatmul.mubr.bf16.gmra.mrb[0].mxu0 %v1722
        %v1843 = vpop.f32.mrb[0].mxu0
        %v1844 = vadd.f32 %v1759, %v1843
        %v1845 = vpop.f32.mrb[0].mxu0
        %v1846 = vpop.f32.mrb[0].mxu0
        %v1847 = vadd.f32 %v1759, %v1846
        %v1848 = vpop.f32.mrb[0].mxu0
        %1849 = vmatprep.mubr.bf16.mxu0 0
        %1850 = vmatmul.mubr.bf16.gmra.mrb[0].mxu0 %v1723
        %v1851 = vpop.f32.mrb[0].mxu0
        %v1852 = vadd.f32 %v1759, %v1851
        %v1853 = vpop.f32.mrb[0].mxu0
        %v1854 = vpop.f32.mrb[0].mxu0
        %v1855 = vadd.f32 %v1759, %v1854
        %v1856 = vpop.f32.mrb[0].mxu0
        %1857 = vmatprep.mubr.bf16.mxu0 0
        %1858 = vmatmul.mubr.bf16.gmra.mrb[0].mxu0 %v1724
        %v1859 = vpop.f32.mrb[0].mxu0
        %v1860 = vadd.f32 %v1759, %v1859
        %v1861 = vpop.f32.mrb[0].mxu0
        %v1862 = vpop.f32.mrb[0].mxu0
        %v1863 = vadd.f32 %v1759, %v1862
        %v1864 = vpop.f32.mrb[0].mxu0
        %1865 = vmatprep.mubr.bf16.mxu0 0
        %1866 = vmatmul.mubr.bf16.gmra.mrb[0].mxu0 %v1725
        %v1867 = vpop.f32.mrb[0].mxu0
        %v1868 = vadd.f32 %v1759, %v1867
        %v1869 = vpop.f32.mrb[0].mxu0
        %v1870 = vpop.f32.mrb[0].mxu0
        %v1871 = vadd.f32 %v1759, %v1870
        %v1872 = vpop.f32.mrb[0].mxu0
        %1873 = vmatprep.mubr.bf16.mxu0 0
        %1874 = vmatmul.mubr.bf16.gmra.mrb[0].mxu0 %v1726
        %v1875 = vpop.f32.mrb[0].mxu0
        %v1876 = vadd.f32 %v1759, %v1875
        %v1877 = vpop.f32.mrb[0].mxu0
        %v1878 = vpop.f32.mrb[0].mxu0
        %v1879 = vadd.f32 %v1759, %v1878
        %v1880 = vpop.f32.mrb[0].mxu0
        %1881 = vmatprep.mubr.bf16.mxu0 0
        %1882 = vmatmul.mubr.bf16.gmra.mrb[0].mxu0 %v1727
        %v1883 = vpop.f32.mrb[0].mxu0
        %v1884 = vadd.f32 %v1759, %v1883
        %v1885 = vpop.f32.mrb[0].mxu0
        %v1886 = vpop.f32.mrb[0].mxu0
        %v1887 = vadd.f32 %v1759, %v1886
        %v1888 = vpop.f32.mrb[0].mxu0
        %1889 = vmatprep.mubr.bf16.mxu0 0
        %1890 = vmatmul.mubr.bf16.gmra.mrb[0].mxu0 %v1728
        %v1891 = vpop.f32.mrb[0].mxu0
        %v1892 = vadd.f32 %v1759, %v1891
        %v1893 = vpop.f32.mrb[0].mxu0
        %v1894 = vpop.f32.mrb[0].mxu0
        %v1895 = vadd.f32 %v1759, %v1894
        %v1896 = vpop.f32.mrb[0].mxu0
        %1897 = vmatprep.mubr.bf16.mxu0 0
        %1898 = vmatmul.mubr.bf16.gmra.mrb[0].mxu0 %v1729
        %v1899 = vpop.f32.mrb[0].mxu0
        %v1900 = vadd.f32 %v1759, %v1899
        %v1901 = vpop.f32.mrb[0].mxu0
        %v1902 = vpop.f32.mrb[0].mxu0
        %v1903 = vadd.f32 %v1759, %v1902
        %v1904 = vpop.f32.mrb[0].mxu0
        %1905 = vmatprep.mubr.bf16.mxu0 0
        %1906 = vmatmul.mubr.bf16.gmra.mrb[0].mxu0 %v1730
        %v1907 = vpop.f32.mrb[0].mxu0
        %v1908 = vadd.f32 %v1759, %v1907
        %v1909 = vpop.f32.mrb[0].mxu0
        %v1910 = vpop.f32.mrb[0].mxu0
        %v1911 = vadd.f32 %v1759, %v1910
        %v1912 = vpop.f32.mrb[0].mxu0
        %1913 = vmatprep.mubr.bf16.mxu0 0
        %1914 = vmatmul.mubr.bf16.gmra.mrb[0].mxu0 %v1731
        %v1915 = vpop.f32.mrb[0].mxu0
        %v1916 = vadd.f32 %v1759, %v1915
        %v1917 = vpop.f32.mrb[0].mxu0
        %v1918 = vpop.f32.mrb[0].mxu0
        %v1919 = vadd.f32 %v1759, %v1918
        %v1920 = vpop.f32.mrb[0].mxu0
        %1921 = vmatprep.mubr.bf16.mxu0 0
        %1922 = vmatmul.mubr.bf16.gmra.mrb[0].mxu0 %v1732
        %v1923 = vpop.f32.mrb[0].mxu0
        %v1924 = vadd.f32 %v1759, %v1923
        %v1925 = vpop.f32.mrb[0].mxu0
        %v1926 = vpop.f32.mrb[0].mxu0
        %v1927 = vadd.f32 %v1759, %v1926
        %v1928 = vpop.f32.mrb[0].mxu0
        %1929 = vmatprep.mubr.bf16.mxu0 0
        %1930 = vmatmul.mubr.bf16.gmra.mrb[0].mxu0 %v1733
        %v1931 = vpop.f32.mrb[0].mxu0
        %v1932 = vadd.f32 %v1759, %v1931
        %v1933 = vpop.f32.mrb[0].mxu0
        %v1934 = vpop.f32.mrb[0].mxu0
        %v1935 = vadd.f32 %v1759, %v1934
        %v1936 = vpop.f32.mrb[0].mxu0
        %1937 = vmatprep.mubr.bf16.mxu0 0
        %1938 = vmatmul.mubr.bf16.gmra.mrb[0].mxu0 %v1734
        %v1939 = vpop.f32.mrb[0].mxu0
        %v1940 = vadd.f32 %v1759, %v1939
        %v1941 = vpop.f32.mrb[0].mxu0
        %v1942 = vpop.f32.mrb[0].mxu0
        %v1943 = vadd.f32 %v1759, %v1942
        %v1944 = vpop.f32.mrb[0].mxu0
        %1945 = vmatprep.mubr.bf16.mxu0 0
        %1946 = vmatmul.mubr.bf16.gmra.mrb[0].mxu0 %v1735
        %v1947 = vpop.f32.mrb[0].mxu0
        %v1948 = vadd.f32 %v1759, %v1947
        %v1949 = vpop.f32.mrb[0].mxu0
        %v1950 = vpop.f32.mrb[0].mxu0
        %v1951 = vadd.f32 %v1759, %v1950
        %v1952 = vpop.f32.mrb[0].mxu0
        %1953 = vmatprep.mubr.bf16.mxu0 0
        %1954 = vmatmul.mubr.bf16.gmra.mrb[0].mxu0 %v1736
        %v1955 = vpop.f32.mrb[0].mxu0
        %v1956 = vadd.f32 %v1759, %v1955
        %v1957 = vpop.f32.mrb[0].mxu0
        %v1958 = vpop.f32.mrb[0].mxu0
        %v1959 = vadd.f32 %v1759, %v1958
        %v1960 = vpop.f32.mrb[0].mxu0
        %1961 = vmatprep.mubr.bf16.mxu0 0
        %1962 = vmatmul.mubr.bf16.gmra.mrb[0].mxu0 %v1737
        %v1963 = vpop.f32.mrb[0].mxu0
        %v1964 = vadd.f32 %v1759, %v1963
        %v1965 = vpop.f32.mrb[0].mxu0
        %v1966 = vpop.f32.mrb[0].mxu0
        %v1967 = vadd.f32 %v1759, %v1966
        %v1968 = vpop.f32.mrb[0].mxu0
        %1969 = vdwg.mxu0
        %v1970 = vld [vmem:[%s298] sm:$0xff]
        %v1971 = vld [vmem:[%s298 + $0x8] sm:$0xff]
        %v1972 = vld [vmem:[%s298 + $0x10] sm:$0xff]
        %v1973 = vld [vmem:[%s298 + $0x18] sm:$0xff]
        %v1974 = vld [vmem:[%s298 + $0x20] sm:$0xff]
        %v1975 = vld [vmem:[%s298 + $0x28] sm:$0xff]
        %v1976 = vld [vmem:[%s298 + $0x30] sm:$0xff]
        %v1977 = vld [vmem:[%s298 + $0x38] sm:$0xff]
        %v1978 = vld [vmem:[%s298 + $0x40] sm:$0xff]
        %v1979 = vld [vmem:[%s298 + $0x48] sm:$0xff]
        %v1980 = vld [vmem:[%s298 + $0x50] sm:$0xff]
        %v1981 = vld [vmem:[%s298 + $0x58] sm:$0xff]
        %v1982 = vld [vmem:[%s298 + $0x60] sm:$0xff]
        %v1983 = vld [vmem:[%s298 + $0x68] sm:$0xff]
        %v1984 = vld [vmem:[%s298 + $0x70] sm:$0xff]
        %v1985 = vld [vmem:[%s298 + $0x78] sm:$0xff]
        %v1986 = vld [vmem:[%s298 + $0x80] sm:$0xff]
        %v1987 = vld [vmem:[%s298 + $0x88] sm:$0xff]
        %v1988 = vld [vmem:[%s298 + $0x90] sm:$0xff]
        %v1989 = vld [vmem:[%s298 + $0x98] sm:$0xff]
        %v1990 = vld [vmem:[%s298 + $0xa0] sm:$0xff]
        %v1991 = vld [vmem:[%s298 + $0xa8] sm:$0xff]
        %v1992 = vld [vmem:[%s298 + $0xb0] sm:$0xff]
        %v1993 = vld [vmem:[%s298 + $0xb8] sm:$0xff]
        %v1994 = vld [vmem:[%s298 + $0xc0] sm:$0xff]
        %v1995 = vld [vmem:[%s298 + $0xc8] sm:$0xff]
        %v1996 = vld [vmem:[%s298 + $0xd0] sm:$0xff]
        %v1997 = vld [vmem:[%s298 + $0xd8] sm:$0xff]
        %v1998 = vld [vmem:[%s298 + $0xe0] sm:$0xff]
        %v1999 = vld [vmem:[%s298 + $0xe8] sm:$0xff]
        %v2000 = vld [vmem:[%s298 + $0xf0] sm:$0xff]
        %v2001 = vld [vmem:[%s298 + $0xf8] sm:$0xff]
        %v2002 = vadd.f32 %v1844, %v1970
        %v2003 = vadd.f32 %v1847, %v1971
        %v2004 = vadd.f32 %v1852, %v1972
        %v2005 = vadd.f32 %v1855, %v1973
        %v2006 = vadd.f32 %v1860, %v1974
        %v2007 = vadd.f32 %v1863, %v1975
        %v2008 = vadd.f32 %v1868, %v1976
        %v2009 = vadd.f32 %v1871, %v1977
        %v2010 = vadd.f32 %v1876, %v1978
        %v2011 = vadd.f32 %v1879, %v1979
        %v2012 = vadd.f32 %v1884, %v1980
        %v2013 = vadd.f32 %v1887, %v1981
        %v2014 = vadd.f32 %v1892, %v1982
        %v2015 = vadd.f32 %v1895, %v1983
        %v2016 = vadd.f32 %v1900, %v1984
        %v2017 = vadd.f32 %v1903, %v1985
        %v2018 = vadd.f32 %v1908, %v1986
        %v2019 = vadd.f32 %v1911, %v1987
        %v2020 = vadd.f32 %v1916, %v1988
        %v2021 = vadd.f32 %v1919, %v1989
        %v2022 = vadd.f32 %v1924, %v1990
        %v2023 = vadd.f32 %v1927, %v1991
        %v2024 = vadd.f32 %v1932, %v1992
        %v2025 = vadd.f32 %v1935, %v1993
        %v2026 = vadd.f32 %v1940, %v1994
        %v2027 = vadd.f32 %v1943, %v1995
        %v2028 = vadd.f32 %v1948, %v1996
        %v2029 = vadd.f32 %v1951, %v1997
        %v2030 = vadd.f32 %v1956, %v1998
        %v2031 = vadd.f32 %v1959, %v1999
        %v2032 = vadd.f32 %v1964, %v2000
        %v2033 = vadd.f32 %v1967, %v2001
        %2034 = vst [vmem:[%s340] sm:$0xff] %v2002
        %2035 = vst [vmem:[%s340 + $0x8] sm:$0xff] %v2003
        %2036 = vst [vmem:[%s340 + $0x10] sm:$0xff] %v2004
        %2037 = vst [vmem:[%s340 + $0x18] sm:$0xff] %v2005
        %2038 = vst [vmem:[%s340 + $0x20] sm:$0xff] %v2006
        %2039 = vst [vmem:[%s340 + $0x28] sm:$0xff] %v2007
        %2040 = vst [vmem:[%s340 + $0x30] sm:$0xff] %v2008
        %2041 = vst [vmem:[%s340 + $0x38] sm:$0xff] %v2009
        %2042 = vst [vmem:[%s340 + $0x40] sm:$0xff] %v2010
        %2043 = vst [vmem:[%s340 + $0x48] sm:$0xff] %v2011
        %2044 = vst [vmem:[%s340 + $0x50] sm:$0xff] %v2012
        %2045 = vst [vmem:[%s340 + $0x58] sm:$0xff] %v2013
        %2046 = vst [vmem:[%s340 + $0x60] sm:$0xff] %v2014
        %2047 = vst [vmem:[%s340 + $0x68] sm:$0xff] %v2015
        %2048 = vst [vmem:[%s340 + $0x70] sm:$0xff] %v2016
        %2049 = vst [vmem:[%s340 + $0x78] sm:$0xff] %v2017
        %2050 = vst [vmem:[%s340 + $0x80] sm:$0xff] %v2018
        %2051 = vst [vmem:[%s340 + $0x88] sm:$0xff] %v2019
        %2052 = vst [vmem:[%s340 + $0x90] sm:$0xff] %v2020
        %2053 = vst [vmem:[%s340 + $0x98] sm:$0xff] %v2021
        %2054 = vst [vmem:[%s340 + $0xa0] sm:$0xff] %v2022
        %2055 = vst [vmem:[%s340 + $0xa8] sm:$0xff] %v2023
        %2056 = vst [vmem:[%s340 + $0xb0] sm:$0xff] %v2024
        %2057 = vst [vmem:[%s340 + $0xb8] sm:$0xff] %v2025
        %2058 = vst [vmem:[%s340 + $0xc0] sm:$0xff] %v2026
        %2059 = vst [vmem:[%s340 + $0xc8] sm:$0xff] %v2027
        %2060 = vst [vmem:[%s340 + $0xd0] sm:$0xff] %v2028
        %2061 = vst [vmem:[%s340 + $0xd8] sm:$0xff] %v2029
        %2062 = vst [vmem:[%s340 + $0xe0] sm:$0xff] %v2030
        %2063 = vst [vmem:[%s340 + $0xe8] sm:$0xff] %v2031
        %2064 = vst [vmem:[%s340 + $0xf0] sm:$0xff] %v2032
        %2065 = vst [vmem:[%s340 + $0xf8] sm:$0xff] %v2033
        %s2066 = sand.u32 %s186, 1
        %s2067 = scalar_lea.sflag [#allocation5], %s2066
        %s2068 = sand.u32 %s186, 1
        %s2069 = smul.addr %s2068, 256
        %s2070 = scalar_lea.vmem [#allocation11], %s2069
        // Predicated region
        $region65: #{tpu_custom_call.1} parent=47 // pred_check
          %p2071 = pneg %p196
        $region66: #{tpu_custom_call.1} parent=47 // pred_check_branch
          %2073 = sbr.rel (%p2071) target = $region68
        $region67: #{tpu_custom_call.1} parent=47 // pred_region
          %s2075 = ssub.s32 4096, 4096
          %2076 = vsyncadd %s2067, %s2075
          %s2077 = smul.addr %s26, 32
          %s2078 = smul.addr %s2077, 128
          %s2079 = scalar_lea.hbm %s7, %s2078
          %s2080 = sshll.u32 %s2070, 4
          %s2081 = int_to_ptr.vmem [resolvable:$true] %s2080
          %2086 = dma.vmem_to_hbm [thread:$0]  %s2081, 4096, %s2079, %s2067, 128, 128, 8
        $region68: #{tpu_custom_call.1} parent=47 // pred_fallthru
          _
      $region48: #{tpu_custom_call.1} parent=5 // pred_fallthru
        _
      %p2087 = scmp.le.s32.totalorder 2, %s21
      // Predicated region
      $region69: #{tpu_custom_call.1} parent=5 // pred_check
        %p2088 = pneg %p2087
      $region70: #{tpu_custom_call.1} parent=5 // pred_check_branch
        %2090 = sbr.rel (%p2088) target = $region72
      $region71: #{tpu_custom_call.1} parent=5 // pred_region
        %s2091 = ssub.s32 %s21, 2
        // Predicated region
        $region73: #{tpu_custom_call.1} parent=71 // pred_check
          %p2092 = pneg %p202
        $region74: #{tpu_custom_call.1} parent=71 // pred_check_branch
          %2094 = sbr.rel (%p2092) target = $region76
        $region75: #{tpu_custom_call.1} parent=71 // pred_region
          %s2095 = sand.u32 %s187, 1
          %s2096 = scalar_lea.sflag [#allocation5], %s2095
          %s2097 = sand.u32 %s187, 1
          %s2098 = smul.addr %s2097, 256
          %s2099 = scalar_lea.vmem [#allocation11], %s2098
          %2100 = dma.done %s2096, 4096
        $region76: #{tpu_custom_call.1} parent=71 // pred_fallthru
          _
      $region72: #{tpu_custom_call.1} parent=5 // pred_fallthru
        _
    $region6: #{tpu_custom_call.1} parent=1 // loop_footer
      %s25 = sadd.s32 1, %s21
    $region7: #{tpu_custom_call.1} parent=1 // loop_footer_branch
      %20 = sbr.rel target = $region3
    $region8: #{tpu_custom_call.1} parent=1 // loop_exit
      _
    %2101 = vsyncpa [#allocation4], 1
    %s2102 = scalar_lea.sflag [#allocation4], 1
    %2103 = vsyncpa %s2102, 1
    %2104 = vsyncpa [#allocation7], 1
    %2105 = vsyncpa [#allocation10], 1
    %2106 = vsyncpa [#allocation5], 1
    %s2107 = scalar_lea.sflag [#allocation5], 1
    %2108 = vsyncpa %s2107, 1

</llo_original>
